<compile_context>
chip_gen: v6e
topology: v6e:2x2x1
jax: 0.10.0
libtpu: 0.0.40
codegen_flags: <defaults>
</compile_context>

<pallas_src>
import functools

import jax
import jax.numpy as jnp
from jax import lax
from jax.experimental import pallas as pl
from jax.experimental.pallas import tpu as pltpu

LANE = 128


def _round_up(v, m):
    return ((v + m - 1) // m) * m


def _vmem_capacity_bytes():
    """Physical VMEM per TensorCore; conservative 64 MiB (v7x) fallback."""
    default = 64 * 1024 * 1024
    try:
        info = pltpu.get_tpu_info()
        for name in ("vmem_capacity_bytes", "vmem_bytes", "vmem_size_bytes"):
            cap = getattr(info, name, None)
            if cap:
                return int(cap)
    except Exception:
        pass
    return default


def classifier_kernel(x_ref,
                      w1, b1, w2, b2, w3, b3, w4, b4, w5, b5, w6, b6,
                      out_ref, acc_ref, *, inv_s, s_tile, seq_len, ragged_s):
    s = pl.program_id(1)

    @pl.when(s == 0)
    def _init():
        acc_ref[...] = jnp.zeros_like(acc_ref)

    # Sequence-sum accumulation in f32.  astype is a no-op for f32 input; for a
    # bf16 encoder output the upcast happens per-tile here (no wrapper copy).
    xt = x_ref[...].astype(jnp.float32)
    if ragged_s:  # static flag: only emit the mask when s_tile does not divide S
        pos = s * s_tile + lax.broadcasted_iota(jnp.int32, (1, s_tile, 1), 1)
        xt = jnp.where(pos < seq_len, xt, 0.0)
    acc_ref[...] += jnp.sum(xt, axis=1)

    @pl.when(s == pl.num_programs(1) - 1)
    def _finalize():
        h = acc_ref[...] * inv_s  # mean over the TRUE sequence length (exact f32)
        # BatchNorm1d (eval) scale/shift is pre-folded into w2..w6 / b2..b6;
        # Dropout is identity in eval mode.  bf16 operands, f32 accumulation.
        for w, b in ((w1, b1), (w2, b2), (w3, b3), (w4, b4), (w5, b5)):
            h = jnp.maximum(
                jnp.dot(h.astype(jnp.bfloat16), w[...],
                        preferred_element_type=jnp.float32)
                + b[...].astype(jnp.float32), 0.0)
        out_ref[...] = (
            jnp.dot(h.astype(jnp.bfloat16), w6[...],
                    preferred_element_type=jnp.float32)
            + b6[...].astype(jnp.float32))


@functools.partial(jax.jit, static_argnames=("num_classes",))
def linear_classifier_forward(x, params, *, num_classes):
    """x: (B, S, D) audio-encoder features (any float dtype). params: 12 bf16 arrays."""
    B, S, D = x.shape
    n_pad = params[-1].shape[1]           # lane-padded logits width (multiple of 128)
    itemsize = jnp.dtype(x.dtype).itemsize

    # Per-generation VMEM budget: 3/4 of physical capacity for the compiler
    # limit (leave headroom, esp. on v7x's 64 MiB), 1/3 of that per x buffer
    # (double-buffered x dominates; params/out/acc are ~2 MiB).
    phys = _vmem_capacity_bytes()
    vmem_limit = max(32 * 1024 * 1024, min((phys * 3) // 4, 100 * 1024 * 1024))
    x_budget = vmem_limit // 3

    # Batch tile: multiple of 8 sublanes, capped at 256 rows (MXU M / VMEM).
    b_tile = min(_round_up(B, 8), 256)
    # Sequence tile: as large as the per-buffer budget allows, multiple of 8.
    s_tile = x_budget // max(1, b_tile * D * itemsize)
    s_tile = max(8, (s_tile // 8) * 8)
    s_tile = min(s_tile, _round_up(S, 8))
    ragged_s = (S % s_tile) != 0

    grid = (pl.cdiv(B, b_tile), pl.cdiv(S, s_tile))

    x_spec = pl.BlockSpec((b_tile, s_tile, D), lambda b, s: (b, s, 0))
    # Parameters: full-array blocks, constant index_map -> DMA'd once, VMEM-resident.
    param_specs = [pl.BlockSpec(p.shape, lambda b, s: (0, 0)) for p in params]
    out_spec = pl.BlockSpec((b_tile, n_pad), lambda b, s: (b, 0))

    dims = [D, 512, 256, 128, 128, 128, n_pad]
    flops = int(2 * B * sum(dims[i] * dims[i + 1] for i in range(6)) + B * S * D)
    bytes_accessed = int(x.size * itemsize + sum(p.size * 2 for p in params)
                         + B * n_pad * 4)

    out = pl.pallas_call(
        functools.partial(classifier_kernel, inv_s=float(1.0 / S),
                          s_tile=s_tile, seq_len=S, ragged_s=ragged_s),
        out_shape=jax.ShapeDtypeStruct((B, n_pad), jnp.float32),
        grid_spec=pltpu.PrefetchScalarGridSpec(
            num_scalar_prefetch=0,
            grid=grid,
            in_specs=[x_spec] + param_specs,
            out_specs=out_spec,
            scratch_shapes=[pltpu.VMEM((b_tile, D), jnp.float32)]),
        compiler_params=pltpu.CompilerParams(
            dimension_semantics=("parallel", "arbitrary"),
            vmem_limit_bytes=int(vmem_limit)),
        cost_estimate=pl.CostEstimate(
            flops=flops, transcendentals=0, bytes_accessed=bytes_accessed),
    )(x, *params)

    return out[:, :num_classes]


def make_params(key, input_dim, num_classes):
    """Raw module parameters: 5x (W, b, bn_scale, bn_shift) + final (W, b), f32."""
    dims = [input_dim, 512, 256, 128, 64, 32]
    flat = []
    k = key
    for i in range(5):
        k, kw, kb, kg, kbe, km, kv = jax.random.split(k, 7)
        d_in, d_out = dims[i], dims[i + 1]
        w = jax.random.normal(kw, (d_in, d_out), jnp.float32) * (1.0 / jnp.sqrt(d_in))
        b = jax.random.normal(kb, (1, d_out), jnp.float32) * 0.01
        gamma = 1.0 + 0.1 * jax.random.normal(kg, (1, d_out), jnp.float32)
        beta = 0.1 * jax.random.normal(kbe, (1, d_out), jnp.float32)
        running_mean = 0.1 * jax.random.normal(km, (1, d_out), jnp.float32)
        running_var = jnp.abs(1.0 + 0.1 * jax.random.normal(kv, (1, d_out), jnp.float32))
        eps = 1e-5
        scale = gamma / jnp.sqrt(running_var + eps)   # BatchNorm1d eval-mode affine
        shift = beta - running_mean * scale
        flat += [w, b, scale, shift]
    k, kw, kb = jax.random.split(k, 3)
    w = jax.random.normal(kw, (dims[-1], num_classes), jnp.float32) * (1.0 / jnp.sqrt(dims[-1]))
    b = jax.random.normal(kb, (1, num_classes), jnp.float32) * 0.01
    flat += [w, b]
    return flat


def prepare_params(raw, num_classes):
    """Fold BN (eval) into the NEXT Linear, lane-pad hidden/logit dims, cast bf16.

    ReLU-out * s + t followed by (W, b) == ReLU-out @ (diag(s) W) + (b + t @ W):
    exact (no nonlinearity in between).  Zero-padding extra rows/columns is also
    exact: padded activations are ReLU(0 + 0) = 0 and hit zero weight rows.
    """
    ws = [raw[4 * i] for i in range(5)] + [raw[-2]]
    bs = [raw[4 * i + 1] for i in range(5)] + [raw[-1]]
    ss = [raw[4 * i + 2] for i in range(5)]
    ts = [raw[4 * i + 3] for i in range(5)]
    for i in range(5):
        bs[i + 1] = bs[i + 1] + ts[i] @ ws[i + 1]     # uses original W_{i+1}
        ws[i + 1] = ws[i + 1] * ss[i].reshape(-1, 1)  # diag(s_i) @ W_{i+1}

    n_pad = _round_up(num_classes, LANE)

    def pad_to(w, b, rows, cols):
        w = jnp.pad(w, ((0, rows - w.shape[0]), (0, cols - w.shape[1])))
        b = jnp.pad(b, ((0, 0), (0, cols - b.shape[1])))
        return w, b

    ws[3], bs[3] = pad_to(ws[3], bs[3], ws[3].shape[0], LANE)   # (128,64) -> (128,128)
    ws[4], bs[4] = pad_to(ws[4], bs[4], LANE, LANE)             # (64,32)  -> (128,128)
    ws[5], bs[5] = pad_to(ws[5], bs[5], LANE, n_pad)            # (32,C)   -> (128,n_pad)

    folded = []
    for w, b in zip(ws, bs):
        folded += [w.astype(jnp.bfloat16), b.astype(jnp.bfloat16)]
    return folded


def reference_forward(x, raw_params):
    """Pure-JAX f32 reference with the module's exact structure (raw params)."""
    h = jnp.mean(x.astype(jnp.float32), axis=1)
    for i in range(5):
        w, b, s, t = raw_params[4 * i:4 * i + 4]
        h = jnp.maximum(h @ w + b, 0.0) * s + t       # Linear -> ReLU -> BN(eval)
    w, b = raw_params[-2:]
    return h @ w + b


if __name__ == "__main__":
    B, S, D = 8, 16, 256          # batch, audio time-steps, encode_audio feature dim
    NUM_CLASSES = 10              # UrbanSound8K

    key = jax.random.PRNGKey(0)
    kx, kp = jax.random.split(key)
    x = jax.random.normal(kx, (B, S, D), jnp.float32)

    raw_params = make_params(kp, D, NUM_CLASSES)
    params = tuple(prepare_params(raw_params, NUM_CLASSES))

    logits = linear_classifier_forward(x, params, num_classes=NUM_CLASSES)
    jax.block_until_ready(logits)

    ref = reference_forward(x, raw_params)
    assert logits.shape == (B, NUM_CLASSES)
    max_diff = jnp.max(jnp.abs(logits - ref))
    # Kernel deviates from pure-f32 module math only via bf16 weight/activation
    # quantization inside the tiny MLP (the mean-pool is exact f32).
    assert jnp.allclose(logits, ref, rtol=5e-2, atol=5e-2), (
        f"mismatch vs reference: max abs diff {max_diff}")

    print("KERNEL_OK")
</pallas_src>

<mosaic_0001>
module attributes {stable_mosaic.version = 11 : i64} {
  func.func @classifier_kernel(%arg0: i32, %arg1: i32, %arg2: memref<8x16x256xf32, #tpu.memory_space<vmem>>, %arg3: memref<256x512xbf16, #tpu.memory_space<vmem>>, %arg4: memref<1x512xbf16, #tpu.memory_space<vmem>>, %arg5: memref<512x256xbf16, #tpu.memory_space<vmem>>, %arg6: memref<1x256xbf16, #tpu.memory_space<vmem>>, %arg7: memref<256x128xbf16, #tpu.memory_space<vmem>>, %arg8: memref<1x128xbf16, #tpu.memory_space<vmem>>, %arg9: memref<128x128xbf16, #tpu.memory_space<vmem>>, %arg10: memref<1x128xbf16, #tpu.memory_space<vmem>>, %arg11: memref<128x128xbf16, #tpu.memory_space<vmem>>, %arg12: memref<1x128xbf16, #tpu.memory_space<vmem>>, %arg13: memref<128x128xbf16, #tpu.memory_space<vmem>>, %arg14: memref<1x128xbf16, #tpu.memory_space<vmem>>, %arg15: memref<8x128xf32, #tpu.memory_space<vmem>>, %arg16: memref<8x256xf32, #tpu.memory_space<vmem>>) attributes {dimension_semantics = [#tpu.dimension_semantics<parallel>, #tpu.dimension_semantics<arbitrary>], iteration_bounds = array<i64: 1, 1>, scalar_prefetch = 0 : i64, scratch_operands = 1 : i64, tpu.core_type = #tpu.core_type<tc>, window_params = [{transform_indices = @transform_0, window_bounds = array<i64: 8, 16, 256>}, {pipeline_mode = #tpu.pipeline_mode<synchronous>, transform_indices = @transform_1, window_bounds = array<i64: 256, 512>}, {pipeline_mode = #tpu.pipeline_mode<synchronous>, transform_indices = @transform_2, window_bounds = array<i64: 1, 512>}, {pipeline_mode = #tpu.pipeline_mode<synchronous>, transform_indices = @transform_3, window_bounds = array<i64: 512, 256>}, {pipeline_mode = #tpu.pipeline_mode<synchronous>, transform_indices = @transform_4, window_bounds = array<i64: 1, 256>}, {pipeline_mode = #tpu.pipeline_mode<synchronous>, transform_indices = @transform_5, window_bounds = array<i64: 256, 128>}, {pipeline_mode = #tpu.pipeline_mode<synchronous>, transform_indices = @transform_6, window_bounds = array<i64: 1, 128>}, {pipeline_mode = #tpu.pipeline_mode<synchronous>, transform_indices = @transform_7, window_bounds = array<i64: 128, 128>}, {pipeline_mode = #tpu.pipeline_mode<synchronous>, transform_indices = @transform_8, window_bounds = array<i64: 1, 128>}, {pipeline_mode = #tpu.pipeline_mode<synchronous>, transform_indices = @transform_9, window_bounds = array<i64: 128, 128>}, {pipeline_mode = #tpu.pipeline_mode<synchronous>, transform_indices = @transform_10, window_bounds = array<i64: 1, 128>}, {pipeline_mode = #tpu.pipeline_mode<synchronous>, transform_indices = @transform_11, window_bounds = array<i64: 128, 128>}, {pipeline_mode = #tpu.pipeline_mode<synchronous>, transform_indices = @transform_12, window_bounds = array<i64: 1, 128>}, {transform_indices = @transform_13, window_bounds = array<i64: 8, 128>}]} {
    %c0_i32 = arith.constant 0 : i32
    %0 = arith.cmpi eq, %arg1, %c0_i32 : i32
    %1 = arith.extui %0 : i1 to i32
    %c0_i32_0 = arith.constant 0 : i32
    %2 = arith.cmpi ne, %1, %c0_i32_0 : i32
    scf.if %2 {
      %cst_9 = arith.constant 0.000000e+00 : f32
      %11 = vector.broadcast %cst_9 : f32 to vector<8x256xf32>
      %c0_10 = arith.constant 0 : index
      %c0_11 = arith.constant 0 : index
      %12 = vector.load %arg16[%c0_10, %c0_11] : memref<8x256xf32, #tpu.memory_space<vmem>>, vector<8x256xf32>
      tpu.vector_store %arg16[%c0_10, %c0_11], %11 {strides = array<i32>} : memref<8x256xf32, #tpu.memory_space<vmem>>, vector<8x256xf32>,
    } else {
    }
    %c0 = arith.constant 0 : index
    %c0_1 = arith.constant 0 : index
    %c0_2 = arith.constant 0 : index
    %3 = vector.load %arg2[%c0, %c0_1, %c0_2] : memref<8x16x256xf32, #tpu.memory_space<vmem>>, vector<8x16x256xf32>
    %c0_3 = arith.constant 0 : index
    %c0_4 = arith.constant 0 : index
    %4 = vector.load %arg16[%c0_3, %c0_4] : memref<8x256xf32, #tpu.memory_space<vmem>>, vector<8x256xf32>
    %cst = arith.constant dense<0.000000e+00> : vector<8x256xf32>
    %5 = vector.multi_reduction <add>, %3, %cst [1] : vector<8x16x256xf32> to vector<8x256xf32>
    %6 = arith.addf %4, %5 : vector<8x256xf32>
    %c0_5 = arith.constant 0 : index
    %c0_6 = arith.constant 0 : index
    %7 = vector.load %arg16[%c0_5, %c0_6] : memref<8x256xf32, #tpu.memory_space<vmem>>, vector<8x256xf32>
    tpu.vector_store %arg16[%c0_5, %c0_6], %6 {strides = array<i32>} : memref<8x256xf32, #tpu.memory_space<vmem>>, vector<8x256xf32>,
    %c0_i32_7 = arith.constant 0 : i32
    %8 = arith.cmpi eq, %arg1, %c0_i32_7 : i32
    %9 = arith.extui %8 : i1 to i32
    %c0_i32_8 = arith.constant 0 : i32
    %10 = arith.cmpi ne, %9, %c0_i32_8 : i32
    scf.if %10 {
      %c0_9 = arith.constant 0 : index
      %c0_10 = arith.constant 0 : index
      %11 = vector.load %arg16[%c0_9, %c0_10] : memref<8x256xf32, #tpu.memory_space<vmem>>, vector<8x256xf32>
      %cst_11 = arith.constant 6.250000e-02 : f32
      %12 = vector.broadcast %cst_11 : f32 to vector<8x256xf32>
      %13 = arith.mulf %11, %12 : vector<8x256xf32>
      %14 = arith.truncf %13 : vector<8x256xf32> to vector<8x256xbf16>
      %c0_12 = arith.constant 0 : index
      %c0_13 = arith.constant 0 : index
      %15 = vector.load %arg3[%c0_12, %c0_13] : memref<256x512xbf16, #tpu.memory_space<vmem>>, vector<256x512xbf16>
      %cst_14 = arith.constant dense<0.000000e+00> : vector<8x512xf32>
      %16 = tpu.matmul %14, %15, %cst_14 {dimension_numbers = #tpu.dot_dimension_numbers<[1], [0], [0], [1], [0, 0, 1, 1], [], []>} : vector<8x256xbf16>, vector<256x512xbf16>, vector<8x512xf32> -> vector<8x512xf32>
      %c0_15 = arith.constant 0 : index
      %c0_16 = arith.constant 0 : index
      %17 = vector.load %arg4[%c0_15, %c0_16] : memref<1x512xbf16, #tpu.memory_space<vmem>>, vector<1x512xbf16>
      %18 = arith.extf %17 : vector<1x512xbf16> to vector<1x512xf32>
      %19 = vector.broadcast %18 : vector<1x512xf32> to vector<8x512xf32>
      %20 = arith.addf %16, %19 : vector<8x512xf32>
      %cst_17 = arith.constant 0.000000e+00 : f32
      %21 = vector.broadcast %cst_17 : f32 to vector<8x512xf32>
      %22 = arith.maximumf %20, %21 : vector<8x512xf32>
      %23 = arith.truncf %22 : vector<8x512xf32> to vector<8x512xbf16>
      %c0_18 = arith.constant 0 : index
      %c0_19 = arith.constant 0 : index
      %24 = vector.load %arg5[%c0_18, %c0_19] : memref<512x256xbf16, #tpu.memory_space<vmem>>, vector<512x256xbf16>
      %cst_20 = arith.constant dense<0.000000e+00> : vector<8x256xf32>
      %25 = tpu.matmul %23, %24, %cst_20 {dimension_numbers = #tpu.dot_dimension_numbers<[1], [0], [0], [1], [0, 0, 1, 1], [], []>} : vector<8x512xbf16>, vector<512x256xbf16>, vector<8x256xf32> -> vector<8x256xf32>
      %c0_21 = arith.constant 0 : index
      %c0_22 = arith.constant 0 : index
      %26 = vector.load %arg6[%c0_21, %c0_22] : memref<1x256xbf16, #tpu.memory_space<vmem>>, vector<1x256xbf16>
      %27 = arith.extf %26 : vector<1x256xbf16> to vector<1x256xf32>
      %28 = vector.broadcast %27 : vector<1x256xf32> to vector<8x256xf32>
      %29 = arith.addf %25, %28 : vector<8x256xf32>
      %cst_23 = arith.constant 0.000000e+00 : f32
      %30 = vector.broadcast %cst_23 : f32 to vector<8x256xf32>
      %31 = arith.maximumf %29, %30 : vector<8x256xf32>
      %32 = arith.truncf %31 : vector<8x256xf32> to vector<8x256xbf16>
      %c0_24 = arith.constant 0 : index
      %c0_25 = arith.constant 0 : index
      %33 = vector.load %arg7[%c0_24, %c0_25] : memref<256x128xbf16, #tpu.memory_space<vmem>>, vector<256x128xbf16>
      %cst_26 = arith.constant dense<0.000000e+00> : vector<8x128xf32>
      %34 = tpu.matmul %32, %33, %cst_26 {dimension_numbers = #tpu.dot_dimension_numbers<[1], [0], [0], [1], [0, 0, 1, 1], [], []>} : vector<8x256xbf16>, vector<256x128xbf16>, vector<8x128xf32> -> vector<8x128xf32>
      %c0_27 = arith.constant 0 : index
      %c0_28 = arith.constant 0 : index
      %35 = vector.load %arg8[%c0_27, %c0_28] : memref<1x128xbf16, #tpu.memory_space<vmem>>, vector<1x128xbf16>
      %36 = arith.extf %35 : vector<1x128xbf16> to vector<1x128xf32>
      %37 = vector.broadcast %36 : vector<1x128xf32> to vector<8x128xf32>
      %38 = arith.addf %34, %37 : vector<8x128xf32>
      %cst_29 = arith.constant 0.000000e+00 : f32
      %39 = vector.broadcast %cst_29 : f32 to vector<8x128xf32>
      %40 = arith.maximumf %38, %39 : vector<8x128xf32>
      %41 = arith.truncf %40 : vector<8x128xf32> to vector<8x128xbf16>
      %c0_30 = arith.constant 0 : index
      %c0_31 = arith.constant 0 : index
      %42 = vector.load %arg9[%c0_30, %c0_31] : memref<128x128xbf16, #tpu.memory_space<vmem>>, vector<128x128xbf16>
      %cst_32 = arith.constant dense<0.000000e+00> : vector<8x128xf32>
      %43 = tpu.matmul %41, %42, %cst_32 {dimension_numbers = #tpu.dot_dimension_numbers<[1], [0], [0], [1], [0, 0, 1, 1], [], []>} : vector<8x128xbf16>, vector<128x128xbf16>, vector<8x128xf32> -> vector<8x128xf32>
      %c0_33 = arith.constant 0 : index
      %c0_34 = arith.constant 0 : index
      %44 = vector.load %arg10[%c0_33, %c0_34] : memref<1x128xbf16, #tpu.memory_space<vmem>>, vector<1x128xbf16>
      %45 = arith.extf %44 : vector<1x128xbf16> to vector<1x128xf32>
      %46 = vector.broadcast %45 : vector<1x128xf32> to vector<8x128xf32>
      %47 = arith.addf %43, %46 : vector<8x128xf32>
      %cst_35 = arith.constant 0.000000e+00 : f32
      %48 = vector.broadcast %cst_35 : f32 to vector<8x128xf32>
      %49 = arith.maximumf %47, %48 : vector<8x128xf32>
      %50 = arith.truncf %49 : vector<8x128xf32> to vector<8x128xbf16>
      %c0_36 = arith.constant 0 : index
      %c0_37 = arith.constant 0 : index
      %51 = vector.load %arg11[%c0_36, %c0_37] : memref<128x128xbf16, #tpu.memory_space<vmem>>, vector<128x128xbf16>
      %cst_38 = arith.constant dense<0.000000e+00> : vector<8x128xf32>
      %52 = tpu.matmul %50, %51, %cst_38 {dimension_numbers = #tpu.dot_dimension_numbers<[1], [0], [0], [1], [0, 0, 1, 1], [], []>} : vector<8x128xbf16>, vector<128x128xbf16>, vector<8x128xf32> -> vector<8x128xf32>
      %c0_39 = arith.constant 0 : index
      %c0_40 = arith.constant 0 : index
      %53 = vector.load %arg12[%c0_39, %c0_40] : memref<1x128xbf16, #tpu.memory_space<vmem>>, vector<1x128xbf16>
      %54 = arith.extf %53 : vector<1x128xbf16> to vector<1x128xf32>
      %55 = vector.broadcast %54 : vector<1x128xf32> to vector<8x128xf32>
      %56 = arith.addf %52, %55 : vector<8x128xf32>
      %cst_41 = arith.constant 0.000000e+00 : f32
      %57 = vector.broadcast %cst_41 : f32 to vector<8x128xf32>
      %58 = arith.maximumf %56, %57 : vector<8x128xf32>
      %59 = arith.truncf %58 : vector<8x128xf32> to vector<8x128xbf16>
      %c0_42 = arith.constant 0 : index
      %c0_43 = arith.constant 0 : index
      %60 = vector.load %arg13[%c0_42, %c0_43] : memref<128x128xbf16, #tpu.memory_space<vmem>>, vector<128x128xbf16>
      %cst_44 = arith.constant dense<0.000000e+00> : vector<8x128xf32>
      %61 = tpu.matmul %59, %60, %cst_44 {dimension_numbers = #tpu.dot_dimension_numbers<[1], [0], [0], [1], [0, 0, 1, 1], [], []>} : vector<8x128xbf16>, vector<128x128xbf16>, vector<8x128xf32> -> vector<8x128xf32>
      %c0_45 = arith.constant 0 : index
      %c0_46 = arith.constant 0 : index
      %62 = vector.load %arg14[%c0_45, %c0_46] : memref<1x128xbf16, #tpu.memory_space<vmem>>, vector<1x128xbf16>
      %63 = arith.extf %62 : vector<1x128xbf16> to vector<1x128xf32>
      %64 = vector.broadcast %63 : vector<1x128xf32> to vector<8x128xf32>
      %65 = arith.addf %61, %64 : vector<8x128xf32>
      %c0_47 = arith.constant 0 : index
      %c0_48 = arith.constant 0 : index
      %66 = vector.load %arg15[%c0_47, %c0_48] : memref<8x128xf32, #tpu.memory_space<vmem>>, vector<8x128xf32>
      tpu.vector_store %arg15[%c0_47, %c0_48], %65 {strides = array<i32>} : memref<8x128xf32, #tpu.memory_space<vmem>>, vector<8x128xf32>,
    } else {
    }
    return
  }
  func.func @transform_0(%arg0: i32, %arg1: i32) -> (i32, i32, i32) {
    %c0_i32 = arith.constant 0 : i32
    %c0_i32_0 = arith.constant 0 : i32
    return %arg0, %arg1, %c0_i32 : i32, i32, i32
  }
  func.func @transform_1(%arg0: i32, %arg1: i32) -> (i32, i32) {
    %c0_i32 = arith.constant 0 : i32
    %c0_i32_0 = arith.constant 0 : i32
    %c0_i32_1 = arith.constant 0 : i32
    return %c0_i32, %c0_i32_0 : i32, i32
  }
  func.func @transform_2(%arg0: i32, %arg1: i32) -> (i32, i32) {
    %c0_i32 = arith.constant 0 : i32
    %c0_i32_0 = arith.constant 0 : i32
    %c0_i32_1 = arith.constant 0 : i32
    return %c0_i32, %c0_i32_0 : i32, i32
  }
  func.func @transform_3(%arg0: i32, %arg1: i32) -> (i32, i32) {
    %c0_i32 = arith.constant 0 : i32
    %c0_i32_0 = arith.constant 0 : i32
    %c0_i32_1 = arith.constant 0 : i32
    return %c0_i32, %c0_i32_0 : i32, i32
  }
  func.func @transform_4(%arg0: i32, %arg1: i32) -> (i32, i32) {
    %c0_i32 = arith.constant 0 : i32
    %c0_i32_0 = arith.constant 0 : i32
    %c0_i32_1 = arith.constant 0 : i32
    return %c0_i32, %c0_i32_0 : i32, i32
  }
  func.func @transform_5(%arg0: i32, %arg1: i32) -> (i32, i32) {
    %c0_i32 = arith.constant 0 : i32
    %c0_i32_0 = arith.constant 0 : i32
    %c0_i32_1 = arith.constant 0 : i32
    return %c0_i32, %c0_i32_0 : i32, i32
  }
  func.func @transform_6(%arg0: i32, %arg1: i32) -> (i32, i32) {
    %c0_i32 = arith.constant 0 : i32
    %c0_i32_0 = arith.constant 0 : i32
    %c0_i32_1 = arith.constant 0 : i32
    return %c0_i32, %c0_i32_0 : i32, i32
  }
  func.func @transform_7(%arg0: i32, %arg1: i32) -> (i32, i32) {
    %c0_i32 = arith.constant 0 : i32
    %c0_i32_0 = arith.constant 0 : i32
    %c0_i32_1 = arith.constant 0 : i32
    return %c0_i32, %c0_i32_0 : i32, i32
  }
  func.func @transform_8(%arg0: i32, %arg1: i32) -> (i32, i32) {
    %c0_i32 = arith.constant 0 : i32
    %c0_i32_0 = arith.constant 0 : i32
    %c0_i32_1 = arith.constant 0 : i32
    return %c0_i32, %c0_i32_0 : i32, i32
  }
  func.func @transform_9(%arg0: i32, %arg1: i32) -> (i32, i32) {
    %c0_i32 = arith.constant 0 : i32
    %c0_i32_0 = arith.constant 0 : i32
    %c0_i32_1 = arith.constant 0 : i32
    return %c0_i32, %c0_i32_0 : i32, i32
  }
  func.func @transform_10(%arg0: i32, %arg1: i32) -> (i32, i32) {
    %c0_i32 = arith.constant 0 : i32
    %c0_i32_0 = arith.constant 0 : i32
    %c0_i32_1 = arith.constant 0 : i32
    return %c0_i32, %c0_i32_0 : i32, i32
  }
  func.func @transform_11(%arg0: i32, %arg1: i32) -> (i32, i32) {
    %c0_i32 = arith.constant 0 : i32
    %c0_i32_0 = arith.constant 0 : i32
    %c0_i32_1 = arith.constant 0 : i32
    return %c0_i32, %c0_i32_0 : i32, i32
  }
  func.func @transform_12(%arg0: i32, %arg1: i32) -> (i32, i32) {
    %c0_i32 = arith.constant 0 : i32
    %c0_i32_0 = arith.constant 0 : i32
    %c0_i32_1 = arith.constant 0 : i32
    return %c0_i32, %c0_i32_0 : i32, i32
  }
  func.func @transform_13(%arg0: i32, %arg1: i32) -> (i32, i32) {
    %c0_i32 = arith.constant 0 : i32
    %c0_i32_0 = arith.constant 0 : i32
    return %arg0, %c0_i32 : i32, i32
  }
}

</mosaic_0001>

<llo_original>
// kernel: linear_classifier_forward.1
$region0: #{linear_classifier_forward.1}
  #allocation0 [shape = 'u32[]', space=smem, size = 0x4, offset = 0x4, fixed_abs, tag = 'smem constant byte address 0x4 - core index']
  #allocation1 [shape = 'u32[144,128]{1,0:T(1,128)}', space=vmem, size = 0x12000, scoped, tag = 'internal scratch']
  #allocation2 [shape = 'f32[8,256]{1,0:T(8,128)}', space=vmem, size = 0x2000, scoped, tag = 'scratch operand']
  %s0 = inlined_call_operand.hbm [shape: f32[8,16,256], index: 0, kind: input, shape index: {}]
  %s1 = inlined_call_operand.hbm [shape: bf16[256,512], index: 1, kind: input, shape index: {}]
  %s2 = inlined_call_operand.hbm [shape: bf16[1,512], index: 2, kind: input, shape index: {}]
  %s3 = inlined_call_operand.hbm [shape: bf16[512,256], index: 3, kind: input, shape index: {}]
  %s4 = inlined_call_operand.vmem [shape: bf16[1,256], index: 4, kind: input, shape index: {}]
  %s5 = inlined_call_operand.hbm [shape: bf16[256,128], index: 5, kind: input, shape index: {}]
  %s6 = inlined_call_operand.vmem [shape: bf16[1,128], index: 6, kind: input, shape index: {}]
  %s7 = inlined_call_operand.hbm [shape: bf16[128,128], index: 7, kind: input, shape index: {}]
  %s8 = inlined_call_operand.vmem [shape: bf16[1,128], index: 8, kind: input, shape index: {}]
  %s9 = inlined_call_operand.hbm [shape: bf16[128,128], index: 9, kind: input, shape index: {}]
  %s10 = inlined_call_operand.vmem [shape: bf16[1,128], index: 10, kind: input, shape index: {}]
  %s11 = inlined_call_operand.hbm [shape: bf16[128,128], index: 11, kind: input, shape index: {}]
  %s12 = inlined_call_operand.vmem [shape: bf16[1,128], index: 12, kind: input, shape index: {}]
  %s13 = inlined_call_operand.hbm [shape: f32[8,128], index: 13, kind: output, shape index: {}]
  %s14 = sld [smem:[#allocation0]]
  $region102: #{linear_classifier_forward.1} parent=0
    _
  %s16 = ssub.s32 1, %s14
  %s17 = scalar_select 0, %s16, %s14
  $region1: #{linear_classifier_forward.1} parent=0
    #allocation3 [shape = 'u8[131072]{0}', space=vmem, size = 0x20000, scoped, tag = 'input window, operand 0, single buffered']
    #allocation4 [shape = 's32[1]{0}', space=sflag, size = 0x4, scoped, tag = 'scoped memory for linear_classifier_forward.1']
    #allocation5 [shape = 's32[1]{0}', space=sflag, size = 0x4, scoped, tag = 'scoped memory for linear_classifier_forward.1']
    #allocation6 [shape = 'u8[262144]{0}', space=vmem, size = 0x40000, scoped, tag = 'input window, operand 1, single buffered']
    #allocation7 [shape = 's32[1]{0}', space=sflag, size = 0x4, scoped, tag = 'scoped memory for linear_classifier_forward.1']
    #allocation8 [shape = 'u8[2048]{0}', space=vmem, size = 0x800, scoped, tag = 'input window, operand 2, single buffered']
    #allocation9 [shape = 'u8[262144]{0}', space=vmem, size = 0x40000, scoped, tag = 'input window, operand 3, single buffered']
    #allocation10 [shape = 's32[1]{0}', space=sflag, size = 0x4, scoped, tag = 'scoped memory for linear_classifier_forward.1']
    #allocation11 [shape = 'u8[65536]{0}', space=vmem, size = 0x10000, scoped, tag = 'input window, operand 5, single buffered']
    #allocation12 [shape = 'u8[32768]{0}', space=vmem, size = 0x8000, scoped, tag = 'input window, operand 7, single buffered']
    #allocation13 [shape = 's32[1]{0}', space=sflag, size = 0x4, scoped, tag = 'scoped memory for linear_classifier_forward.1']
    #allocation14 [shape = 'u8[32768]{0}', space=vmem, size = 0x8000, scoped, tag = 'input window, operand 9, single buffered']
    #allocation15 [shape = 'u8[32768]{0}', space=vmem, size = 0x8000, scoped, tag = 'input window, operand 11, single buffered']
    #allocation16 [shape = 's32[1]{0}', space=sflag, size = 0x4, scoped, tag = 'scoped memory for linear_classifier_forward.1']
    #allocation17 [shape = 'u8[4096]{0}', space=vmem, size = 0x1000, scoped, tag = 'output window, operand 0, single buffered']
    %18 = vsyncpa [#allocation4], 0
    %19 = vsyncpa [#allocation7], 0
    %20 = vsyncpa [#allocation10], 0
    %21 = vsyncpa [#allocation13], 0
    %22 = vsyncpa [#allocation16], 0
    %23 = vsyncpa [#allocation5], 0
    // Predicated region
    $region2: #{linear_classifier_forward.1} parent=1 // pred_check
      _
    $region3: #{linear_classifier_forward.1} parent=1 // pred_check_branch
      %25 = sbr.rel (0) target = $region5
    $region4: #{linear_classifier_forward.1} parent=1 // pred_region
      %s27 = ssub.s32 4096, 4096
      %28 = vsyncadd [#allocation4], %s27
      %s29 = sshll.u32 [#allocation3], 4
      %s30 = int_to_ptr.vmem [resolvable:$true] %s29
      %35 = dma.hbm_to_vmem [thread:$0]  %s0, 4096, %s30, [#allocation4], 256, 256, 16
    $region5: #{linear_classifier_forward.1} parent=1 // pred_fallthru
      _
    // Predicated region
    $region6: #{linear_classifier_forward.1} parent=1 // pred_check
      _
    $region7: #{linear_classifier_forward.1} parent=1 // pred_check_branch
      %37 = sbr.rel (0) target = $region9
    $region8: #{linear_classifier_forward.1} parent=1 // pred_region
      %s39 = ssub.s32 8192, 8192
      %40 = vsyncadd [#allocation7], %s39
      %s41 = sshll.u32 [#allocation6], 4
      %s42 = int_to_ptr.vmem [resolvable:$true] %s41
      %47 = dma.hbm_to_vmem [thread:$0]  %s1, 8192, %s42, [#allocation7], 256, 256, 16
    $region9: #{linear_classifier_forward.1} parent=1 // pred_fallthru
      _
    // Predicated region
    $region10: #{linear_classifier_forward.1} parent=1 // pred_check
      _
    $region11: #{linear_classifier_forward.1} parent=1 // pred_check_branch
      %49 = sbr.rel (0) target = $region13
    $region12: #{linear_classifier_forward.1} parent=1 // pred_region
      %s51 = ssub.s32 64, 64
      %52 = vsyncadd [#allocation7], %s51
      %s54 = sshll.u32 [#allocation8], 4
      %s55 = int_to_ptr.vmem [resolvable:$true] %s54
      %57 = dma.hbm_to_vmem [thread:$0]  %s2, 64, %s55, [#allocation7]
    $region13: #{linear_classifier_forward.1} parent=1 // pred_fallthru
      _
    // Predicated region
    $region14: #{linear_classifier_forward.1} parent=1 // pred_check
      _
    $region15: #{linear_classifier_forward.1} parent=1 // pred_check_branch
      %59 = sbr.rel (0) target = $region17
    $region16: #{linear_classifier_forward.1} parent=1 // pred_region
      %s61 = ssub.s32 8192, 8192
      %62 = vsyncadd [#allocation10], %s61
      %s63 = sshll.u32 [#allocation9], 4
      %s64 = int_to_ptr.vmem [resolvable:$true] %s63
      %69 = dma.hbm_to_vmem [thread:$0]  %s3, 8192, %s64, [#allocation10], 128, 128, 8
    $region17: #{linear_classifier_forward.1} parent=1 // pred_fallthru
      _
    // Predicated region
    $region18: #{linear_classifier_forward.1} parent=1 // pred_check
      _
    $region19: #{linear_classifier_forward.1} parent=1 // pred_check_branch
      %71 = sbr.rel (0) target = $region21
    $region20: #{linear_classifier_forward.1} parent=1 // pred_region
      _
    $region21: #{linear_classifier_forward.1} parent=1 // pred_fallthru
      _
    // Predicated region
    $region22: #{linear_classifier_forward.1} parent=1 // pred_check
      _
    $region23: #{linear_classifier_forward.1} parent=1 // pred_check_branch
      %73 = sbr.rel (0) target = $region25
    $region24: #{linear_classifier_forward.1} parent=1 // pred_region
      %s75 = ssub.s32 2048, 2048
      %76 = vsyncadd [#allocation10], %s75
      %s77 = sshll.u32 [#allocation11], 4
      %s78 = int_to_ptr.vmem [resolvable:$true] %s77
      %83 = dma.hbm_to_vmem [thread:$0]  %s5, 2048, %s78, [#allocation10], 64, 64, 4
    $region25: #{linear_classifier_forward.1} parent=1 // pred_fallthru
      _
    // Predicated region
    $region26: #{linear_classifier_forward.1} parent=1 // pred_check
      _
    $region27: #{linear_classifier_forward.1} parent=1 // pred_check_branch
      %85 = sbr.rel (0) target = $region29
    $region28: #{linear_classifier_forward.1} parent=1 // pred_region
      _
    $region29: #{linear_classifier_forward.1} parent=1 // pred_fallthru
      _
    // Predicated region
    $region30: #{linear_classifier_forward.1} parent=1 // pred_check
      _
    $region31: #{linear_classifier_forward.1} parent=1 // pred_check_branch
      %87 = sbr.rel (0) target = $region33
    $region32: #{linear_classifier_forward.1} parent=1 // pred_region
      %s89 = ssub.s32 1024, 1024
      %90 = vsyncadd [#allocation13], %s89
      %s91 = sshll.u32 [#allocation12], 4
      %s92 = int_to_ptr.vmem [resolvable:$true] %s91
      %97 = dma.hbm_to_vmem [thread:$0]  %s7, 1024, %s92, [#allocation13], 64, 64, 4
    $region33: #{linear_classifier_forward.1} parent=1 // pred_fallthru
      _
    // Predicated region
    $region34: #{linear_classifier_forward.1} parent=1 // pred_check
      _
    $region35: #{linear_classifier_forward.1} parent=1 // pred_check_branch
      %99 = sbr.rel (0) target = $region37
    $region36: #{linear_classifier_forward.1} parent=1 // pred_region
      _
    $region37: #{linear_classifier_forward.1} parent=1 // pred_fallthru
      _
    // Predicated region
    $region38: #{linear_classifier_forward.1} parent=1 // pred_check
      _
    $region39: #{linear_classifier_forward.1} parent=1 // pred_check_branch
      %101 = sbr.rel (0) target = $region41
    $region40: #{linear_classifier_forward.1} parent=1 // pred_region
      %s103 = ssub.s32 1024, 1024
      %104 = vsyncadd [#allocation13], %s103
      %s105 = sshll.u32 [#allocation14], 4
      %s106 = int_to_ptr.vmem [resolvable:$true] %s105
      %111 = dma.hbm_to_vmem [thread:$0]  %s9, 1024, %s106, [#allocation13], 64, 64, 4
    $region41: #{linear_classifier_forward.1} parent=1 // pred_fallthru
      _
    // Predicated region
    $region42: #{linear_classifier_forward.1} parent=1 // pred_check
      _
    $region43: #{linear_classifier_forward.1} parent=1 // pred_check_branch
      %113 = sbr.rel (0) target = $region45
    $region44: #{linear_classifier_forward.1} parent=1 // pred_region
      _
    $region45: #{linear_classifier_forward.1} parent=1 // pred_fallthru
      _
    // Predicated region
    $region46: #{linear_classifier_forward.1} parent=1 // pred_check
      _
    $region47: #{linear_classifier_forward.1} parent=1 // pred_check_branch
      %115 = sbr.rel (0) target = $region49
    $region48: #{linear_classifier_forward.1} parent=1 // pred_region
      %s117 = ssub.s32 1024, 1024
      %118 = vsyncadd [#allocation16], %s117
      %s119 = sshll.u32 [#allocation15], 4
      %s120 = int_to_ptr.vmem [resolvable:$true] %s119
      %125 = dma.hbm_to_vmem [thread:$0]  %s11, 1024, %s120, [#allocation16], 64, 64, 4
    $region49: #{linear_classifier_forward.1} parent=1 // pred_fallthru
      _
    // Predicated region
    $region50: #{linear_classifier_forward.1} parent=1 // pred_check
      _
    $region51: #{linear_classifier_forward.1} parent=1 // pred_check_branch
      %127 = sbr.rel (0) target = $region53
    $region52: #{linear_classifier_forward.1} parent=1 // pred_region
      _
    $region53: #{linear_classifier_forward.1} parent=1 // pred_fallthru
      _
    // Predicated region
    $region54: #{linear_classifier_forward.1} parent=1 // pred_check
      _
    $region55: #{linear_classifier_forward.1} parent=1 // pred_check_branch
      %129 = sbr.rel (0) target = $region57
    $region56: #{linear_classifier_forward.1} parent=1 // pred_region
      %130 = dma.done [#allocation4], 4096
    $region57: #{linear_classifier_forward.1} parent=1 // pred_fallthru
      _
    // Predicated region
    $region58: #{linear_classifier_forward.1} parent=1 // pred_check
      _
    $region59: #{linear_classifier_forward.1} parent=1 // pred_check_branch
      %132 = sbr.rel (0) target = $region61
    $region60: #{linear_classifier_forward.1} parent=1 // pred_region
      %133 = dma.done [#allocation7], 8192
    $region61: #{linear_classifier_forward.1} parent=1 // pred_fallthru
      _
    // Predicated region
    $region62: #{linear_classifier_forward.1} parent=1 // pred_check
      _
    $region63: #{linear_classifier_forward.1} parent=1 // pred_check_branch
      %135 = sbr.rel (0) target = $region65
    $region64: #{linear_classifier_forward.1} parent=1 // pred_region
      %136 = dma.done [#allocation7], 64
    $region65: #{linear_classifier_forward.1} parent=1 // pred_fallthru
      _
    // Predicated region
    $region66: #{linear_classifier_forward.1} parent=1 // pred_check
      _
    $region67: #{linear_classifier_forward.1} parent=1 // pred_check_branch
      %138 = sbr.rel (0) target = $region69
    $region68: #{linear_classifier_forward.1} parent=1 // pred_region
      %139 = dma.done [#allocation10], 8192
    $region69: #{linear_classifier_forward.1} parent=1 // pred_fallthru
      _
    // Predicated region
    $region70: #{linear_classifier_forward.1} parent=1 // pred_check
      _
    $region71: #{linear_classifier_forward.1} parent=1 // pred_check_branch
      %141 = sbr.rel (0) target = $region73
    $region72: #{linear_classifier_forward.1} parent=1 // pred_region
      %142 = dma.done [#allocation10], 2048
    $region73: #{linear_classifier_forward.1} parent=1 // pred_fallthru
      _
    // Predicated region
    $region74: #{linear_classifier_forward.1} parent=1 // pred_check
      _
    $region75: #{linear_classifier_forward.1} parent=1 // pred_check_branch
      %144 = sbr.rel (0) target = $region77
    $region76: #{linear_classifier_forward.1} parent=1 // pred_region
      %145 = dma.done [#allocation13], 1024
    $region77: #{linear_classifier_forward.1} parent=1 // pred_fallthru
      _
    // Predicated region
    $region78: #{linear_classifier_forward.1} parent=1 // pred_check
      _
    $region79: #{linear_classifier_forward.1} parent=1 // pred_check_branch
      %147 = sbr.rel (0) target = $region81
    $region80: #{linear_classifier_forward.1} parent=1 // pred_region
      %148 = dma.done [#allocation13], 1024
    $region81: #{linear_classifier_forward.1} parent=1 // pred_fallthru
      _
    // Predicated region
    $region82: #{linear_classifier_forward.1} parent=1 // pred_check
      _
    $region83: #{linear_classifier_forward.1} parent=1 // pred_check_branch
      %150 = sbr.rel (0) target = $region85
    $region84: #{linear_classifier_forward.1} parent=1 // pred_region
      %151 = dma.done [#allocation16], 1024
    $region85: #{linear_classifier_forward.1} parent=1 // pred_fallthru
      _
    %p153 = scmp.eq.s32.totalorder 0, 0
    // Predicated region
    $region86: #{linear_classifier_forward.1} parent=1 // pred_check
      %p154 = pneg %p153
    $region87: #{linear_classifier_forward.1} parent=1 // pred_check_branch
      %156 = sbr.rel (%p154) target = $region89
    $region88: #{linear_classifier_forward.1} parent=1 // pred_region
      %157 = vst [vmem:[#allocation2] sm:$0xff] 0.0
      %158 = vst [vmem:[#allocation2 + $0x8] sm:$0xff] 0.0
    $region89: #{linear_classifier_forward.1} parent=1 // pred_fallthru
      _
    %v159 = vld [vmem:[#allocation3] sm:$0xff]
    %v160 = vld [vmem:[#allocation3 + $0x8] sm:$0xff]
    %v161 = vld [vmem:[#allocation3 + $0x10] sm:$0xff]
    %v162 = vld [vmem:[#allocation3 + $0x18] sm:$0xff]
    %v163 = vld [vmem:[#allocation3 + $0x20] sm:$0xff]
    %v164 = vld [vmem:[#allocation3 + $0x28] sm:$0xff]
    %v165 = vld [vmem:[#allocation3 + $0x30] sm:$0xff]
    %v166 = vld [vmem:[#allocation3 + $0x38] sm:$0xff]
    %v167 = vld [vmem:[#allocation3 + $0x40] sm:$0xff]
    %v168 = vld [vmem:[#allocation3 + $0x48] sm:$0xff]
    %v169 = vld [vmem:[#allocation3 + $0x50] sm:$0xff]
    %v170 = vld [vmem:[#allocation3 + $0x58] sm:$0xff]
    %v171 = vld [vmem:[#allocation3 + $0x60] sm:$0xff]
    %v172 = vld [vmem:[#allocation3 + $0x68] sm:$0xff]
    %v173 = vld [vmem:[#allocation3 + $0x70] sm:$0xff]
    %v174 = vld [vmem:[#allocation3 + $0x78] sm:$0xff]
    %v175 = vld [vmem:[#allocation3 + $0x80] sm:$0xff]
    %v176 = vld [vmem:[#allocation3 + $0x88] sm:$0xff]
    %v177 = vld [vmem:[#allocation3 + $0x90] sm:$0xff]
    %v178 = vld [vmem:[#allocation3 + $0x98] sm:$0xff]
    %v179 = vld [vmem:[#allocation3 + $0xa0] sm:$0xff]
    %v180 = vld [vmem:[#allocation3 + $0xa8] sm:$0xff]
    %v181 = vld [vmem:[#allocation3 + $0xb0] sm:$0xff]
    %v182 = vld [vmem:[#allocation3 + $0xb8] sm:$0xff]
    %v183 = vld [vmem:[#allocation3 + $0xc0] sm:$0xff]
    %v184 = vld [vmem:[#allocation3 + $0xc8] sm:$0xff]
    %v185 = vld [vmem:[#allocation3 + $0xd0] sm:$0xff]
    %v186 = vld [vmem:[#allocation3 + $0xd8] sm:$0xff]
    %v187 = vld [vmem:[#allocation3 + $0xe0] sm:$0xff]
    %v188 = vld [vmem:[#allocation3 + $0xe8] sm:$0xff]
    %v189 = vld [vmem:[#allocation3 + $0xf0] sm:$0xff]
    %v190 = vld [vmem:[#allocation3 + $0xf8] sm:$0xff]
    %v191 = vld [vmem:[#allocation2] sm:$0xff]
    %v192 = vld [vmem:[#allocation2 + $0x8] sm:$0xff]
    %v193 = vadd.f32 %v159, %v161
    %v194 = vrot.slane %v193, 4
    %v195 = vadd.f32 %v193, %v194
    %v196 = vrot.slane %v195, 2
    %v197 = vadd.f32 %v195, %v196
    %v198 = vrot.slane %v197, 1
    %v199 = vadd.f32 %v197, %v198
    %v200 = vadd.f32 %v160, %v162
    %v201 = vrot.slane %v200, 4
    %v202 = vadd.f32 %v200, %v201
    %v203 = vrot.slane %v202, 2
    %v204 = vadd.f32 %v202, %v203
    %v205 = vrot.slane %v204, 1
    %v206 = vadd.f32 %v204, %v205
    %v207 = vadd.f32 %v163, %v165
    %v208 = vrot.slane %v207, 4
    %v209 = vadd.f32 %v207, %v208
    %v210 = vrot.slane %v209, 2
    %v211 = vadd.f32 %v209, %v210
    %v212 = vrot.slane %v211, 1
    %v213 = vadd.f32 %v211, %v212
    %v214 = vadd.f32 %v164, %v166
    %v215 = vrot.slane %v214, 4
    %v216 = vadd.f32 %v214, %v215
    %v217 = vrot.slane %v216, 2
    %v218 = vadd.f32 %v216, %v217
    %v219 = vrot.slane %v218, 1
    %v220 = vadd.f32 %v218, %v219
    %v221 = vadd.f32 %v167, %v169
    %v222 = vrot.slane %v221, 4
    %v223 = vadd.f32 %v221, %v222
    %v224 = vrot.slane %v223, 2
    %v225 = vadd.f32 %v223, %v224
    %v226 = vrot.slane %v225, 1
    %v227 = vadd.f32 %v225, %v226
    %v228 = vadd.f32 %v168, %v170
    %v229 = vrot.slane %v228, 4
    %v230 = vadd.f32 %v228, %v229
    %v231 = vrot.slane %v230, 2
    %v232 = vadd.f32 %v230, %v231
    %v233 = vrot.slane %v232, 1
    %v234 = vadd.f32 %v232, %v233
    %v235 = vadd.f32 %v171, %v173
    %v236 = vrot.slane %v235, 4
    %v237 = vadd.f32 %v235, %v236
    %v238 = vrot.slane %v237, 2
    %v239 = vadd.f32 %v237, %v238
    %v240 = vrot.slane %v239, 1
    %v241 = vadd.f32 %v239, %v240
    %v242 = vadd.f32 %v172, %v174
    %v243 = vrot.slane %v242, 4
    %v244 = vadd.f32 %v242, %v243
    %v245 = vrot.slane %v244, 2
    %v246 = vadd.f32 %v244, %v245
    %v247 = vrot.slane %v246, 1
    %v248 = vadd.f32 %v246, %v247
    %v249 = vadd.f32 %v175, %v177
    %v250 = vrot.slane %v249, 4
    %v251 = vadd.f32 %v249, %v250
    %v252 = vrot.slane %v251, 2
    %v253 = vadd.f32 %v251, %v252
    %v254 = vrot.slane %v253, 1
    %v255 = vadd.f32 %v253, %v254
    %v256 = vadd.f32 %v176, %v178
    %v257 = vrot.slane %v256, 4
    %v258 = vadd.f32 %v256, %v257
    %v259 = vrot.slane %v258, 2
    %v260 = vadd.f32 %v258, %v259
    %v261 = vrot.slane %v260, 1
    %v262 = vadd.f32 %v260, %v261
    %v263 = vadd.f32 %v179, %v181
    %v264 = vrot.slane %v263, 4
    %v265 = vadd.f32 %v263, %v264
    %v266 = vrot.slane %v265, 2
    %v267 = vadd.f32 %v265, %v266
    %v268 = vrot.slane %v267, 1
    %v269 = vadd.f32 %v267, %v268
    %v270 = vadd.f32 %v180, %v182
    %v271 = vrot.slane %v270, 4
    %v272 = vadd.f32 %v270, %v271
    %v273 = vrot.slane %v272, 2
    %v274 = vadd.f32 %v272, %v273
    %v275 = vrot.slane %v274, 1
    %v276 = vadd.f32 %v274, %v275
    %v277 = vadd.f32 %v183, %v185
    %v278 = vrot.slane %v277, 4
    %v279 = vadd.f32 %v277, %v278
    %v280 = vrot.slane %v279, 2
    %v281 = vadd.f32 %v279, %v280
    %v282 = vrot.slane %v281, 1
    %v283 = vadd.f32 %v281, %v282
    %v284 = vadd.f32 %v184, %v186
    %v285 = vrot.slane %v284, 4
    %v286 = vadd.f32 %v284, %v285
    %v287 = vrot.slane %v286, 2
    %v288 = vadd.f32 %v286, %v287
    %v289 = vrot.slane %v288, 1
    %v290 = vadd.f32 %v288, %v289
    %v291 = vadd.f32 %v187, %v189
    %v292 = vrot.slane %v291, 4
    %v293 = vadd.f32 %v291, %v292
    %v294 = vrot.slane %v293, 2
    %v295 = vadd.f32 %v293, %v294
    %v296 = vrot.slane %v295, 1
    %v297 = vadd.f32 %v295, %v296
    %v298 = vadd.f32 %v188, %v190
    %v299 = vrot.slane %v298, 4
    %v300 = vadd.f32 %v298, %v299
    %v301 = vrot.slane %v300, 2
    %v302 = vadd.f32 %v300, %v301
    %v303 = vrot.slane %v302, 1
    %v304 = vadd.f32 %v302, %v303
    %vm321 = vcmask 1041409
    %v322 = vsel %vm321, %v213, %v199
    %vm323 = vcmask 1042434
    %v324 = vsel %vm323, %v227, %v322
    %vm325 = vcmask 1043459
    %v326 = vsel %vm325, %v241, %v324
    %vm327 = vcmask 1044484
    %v328 = vsel %vm327, %v255, %v326
    %vm329 = vcmask 1045509
    %v330 = vsel %vm329, %v269, %v328
    %vm331 = vcmask 1046534
    %v332 = vsel %vm331, %v283, %v330
    %vm333 = vcmask 1047559
    %v334 = vsel %vm333, %v297, %v332
    %v335 = vsel %vm321, %v220, %v206
    %v336 = vsel %vm323, %v234, %v335
    %v337 = vsel %vm325, %v248, %v336
    %v338 = vsel %vm327, %v262, %v337
    %v339 = vsel %vm329, %v276, %v338
    %v340 = vsel %vm331, %v290, %v339
    %v341 = vsel %vm333, %v304, %v340
    %v344 = vadd.f32 %v191, %v334
    %v345 = vadd.f32 %v192, %v341
    %346 = vst [vmem:[#allocation2] sm:$0xff] %v344
    %347 = vst [vmem:[#allocation2 + $0x8] sm:$0xff] %v345
    // Predicated region
    $region90: #{linear_classifier_forward.1} parent=1 // pred_check
      %p348 = pneg %p153
    $region91: #{linear_classifier_forward.1} parent=1 // pred_check_branch
      %350 = sbr.rel (%p348) target = $region93
    $region92: #{linear_classifier_forward.1} parent=1 // pred_region
      %v351 = vld [vmem:[#allocation2] sm:$0xff]
      %v352 = vld [vmem:[#allocation2 + $0x8] sm:$0xff]
      %v353 = vmul.f32 %v351, 0.0625
      %v354 = vmul.f32 %v352, 0.0625
      %v355 = vpack.c.bf16 %v353, %v353
      %v356 = vpack.c.bf16 %v354, %v354
      %v357 = vld [vmem:[#allocation6] sm:$0xff]
      %v358 = vld [vmem:[#allocation6 + $0x8] sm:$0xff]
      %v359 = vld [vmem:[#allocation6 + $0x10] sm:$0xff]
      %v360 = vld [vmem:[#allocation6 + $0x18] sm:$0xff]
      %v361 = vld [vmem:[#allocation6 + $0x20] sm:$0xff]
      %v362 = vld [vmem:[#allocation6 + $0x28] sm:$0xff]
      %v363 = vld [vmem:[#allocation6 + $0x30] sm:$0xff]
      %v364 = vld [vmem:[#allocation6 + $0x38] sm:$0xff]
      %v365 = vld [vmem:[#allocation6 + $0x40] sm:$0xff]
      %v366 = vld [vmem:[#allocation6 + $0x48] sm:$0xff]
      %v367 = vld [vmem:[#allocation6 + $0x50] sm:$0xff]
      %v368 = vld [vmem:[#allocation6 + $0x58] sm:$0xff]
      %v369 = vld [vmem:[#allocation6 + $0x60] sm:$0xff]
      %v370 = vld [vmem:[#allocation6 + $0x68] sm:$0xff]
      %v371 = vld [vmem:[#allocation6 + $0x70] sm:$0xff]
      %v372 = vld [vmem:[#allocation6 + $0x78] sm:$0xff]
      %v373 = vld [vmem:[#allocation6 + $0x80] sm:$0xff]
      %v374 = vld [vmem:[#allocation6 + $0x88] sm:$0xff]
      %v375 = vld [vmem:[#allocation6 + $0x90] sm:$0xff]
      %v376 = vld [vmem:[#allocation6 + $0x98] sm:$0xff]
      %v377 = vld [vmem:[#allocation6 + $0xa0] sm:$0xff]
      %v378 = vld [vmem:[#allocation6 + $0xa8] sm:$0xff]
      %v379 = vld [vmem:[#allocation6 + $0xb0] sm:$0xff]
      %v380 = vld [vmem:[#allocation6 + $0xb8] sm:$0xff]
      %v381 = vld [vmem:[#allocation6 + $0xc0] sm:$0xff]
      %v382 = vld [vmem:[#allocation6 + $0xc8] sm:$0xff]
      %v383 = vld [vmem:[#allocation6 + $0xd0] sm:$0xff]
      %v384 = vld [vmem:[#allocation6 + $0xd8] sm:$0xff]
      %v385 = vld [vmem:[#allocation6 + $0xe0] sm:$0xff]
      %v386 = vld [vmem:[#allocation6 + $0xe8] sm:$0xff]
      %v387 = vld [vmem:[#allocation6 + $0xf0] sm:$0xff]
      %v388 = vld [vmem:[#allocation6 + $0xf8] sm:$0xff]
      %v389 = vld [vmem:[#allocation6 + $0x100] sm:$0xff]
      %v390 = vld [vmem:[#allocation6 + $0x108] sm:$0xff]
      %v391 = vld [vmem:[#allocation6 + $0x110] sm:$0xff]
      %v392 = vld [vmem:[#allocation6 + $0x118] sm:$0xff]
      %v393 = vld [vmem:[#allocation6 + $0x120] sm:$0xff]
      %v394 = vld [vmem:[#allocation6 + $0x128] sm:$0xff]
      %v395 = vld [vmem:[#allocation6 + $0x130] sm:$0xff]
      %v396 = vld [vmem:[#allocation6 + $0x138] sm:$0xff]
      %v397 = vld [vmem:[#allocation6 + $0x140] sm:$0xff]
      %v398 = vld [vmem:[#allocation6 + $0x148] sm:$0xff]
      %v399 = vld [vmem:[#allocation6 + $0x150] sm:$0xff]
      %v400 = vld [vmem:[#allocation6 + $0x158] sm:$0xff]
      %v401 = vld [vmem:[#allocation6 + $0x160] sm:$0xff]
      %v402 = vld [vmem:[#allocation6 + $0x168] sm:$0xff]
      %v403 = vld [vmem:[#allocation6 + $0x170] sm:$0xff]
      %v404 = vld [vmem:[#allocation6 + $0x178] sm:$0xff]
      %v405 = vld [vmem:[#allocation6 + $0x180] sm:$0xff]
      %v406 = vld [vmem:[#allocation6 + $0x188] sm:$0xff]
      %v407 = vld [vmem:[#allocation6 + $0x190] sm:$0xff]
      %v408 = vld [vmem:[#allocation6 + $0x198] sm:$0xff]
      %v409 = vld [vmem:[#allocation6 + $0x1a0] sm:$0xff]
      %v410 = vld [vmem:[#allocation6 + $0x1a8] sm:$0xff]
      %v411 = vld [vmem:[#allocation6 + $0x1b0] sm:$0xff]
      %v412 = vld [vmem:[#allocation6 + $0x1b8] sm:$0xff]
      %v413 = vld [vmem:[#allocation6 + $0x1c0] sm:$0xff]
      %v414 = vld [vmem:[#allocation6 + $0x1c8] sm:$0xff]
      %v415 = vld [vmem:[#allocation6 + $0x1d0] sm:$0xff]
      %v416 = vld [vmem:[#allocation6 + $0x1d8] sm:$0xff]
      %v417 = vld [vmem:[#allocation6 + $0x1e0] sm:$0xff]
      %v418 = vld [vmem:[#allocation6 + $0x1e8] sm:$0xff]
      %v419 = vld [vmem:[#allocation6 + $0x1f0] sm:$0xff]
      %v420 = vld [vmem:[#allocation6 + $0x1f8] sm:$0xff]
      %v421 = vld [vmem:[#allocation8] sm:$0xf]
      %v422 = vunpack.c.l.bf16 %v421
      %v424 = vlaneseq
      %v425 = vshrl.u32 %v424, 7
      %v426 = vsub.s32 0, %v425
      %v427 = vrot.slane %v422, %v426
      %v428 = vlaneseq
      %v429 = vshrl.u32 %v428, 7
      %v430 = vsub.s32 2, %v429
      %v431 = vrot.slane %v422, %v430
      %v432 = vlaneseq
      %v433 = vshrl.u32 %v432, 7
      %v434 = vsub.s32 4, %v433
      %v435 = vrot.slane %v422, %v434
      %v436 = vlaneseq
      %v437 = vshrl.u32 %v436, 7
      %v438 = vsub.s32 6, %v437
      %v439 = vrot.slane %v422, %v438
      %v444 = vlaneseq
      %v445 = vshrl.u32 %v444, 7
      %v446 = vsub.s32 0, %v445
      %v447 = vrot.slane %v427, %v446
      %v448 = vlaneseq
      %v449 = vshrl.u32 %v448, 7
      %v450 = vsub.s32 0, %v449
      %v451 = vrot.slane %v431, %v450
      %v452 = vlaneseq
      %v453 = vshrl.u32 %v452, 7
      %v454 = vsub.s32 0, %v453
      %v455 = vrot.slane %v435, %v454
      %v456 = vlaneseq
      %v457 = vshrl.u32 %v456, 7
      %v458 = vsub.s32 0, %v457
      %v459 = vrot.slane %v439, %v458
      %v524 = vunpack.c.l.b16 %v357
      %v525 = vunpack.c.h.b16 %v357
      %v526 = vunpack.c.l.b16 %v358
      %v527 = vunpack.c.h.b16 %v358
      %v528 = vunpack.c.l.b16 %v359
      %v529 = vunpack.c.h.b16 %v359
      %v530 = vunpack.c.l.b16 %v360
      %v531 = vunpack.c.h.b16 %v360
      %v532 = vunpack.c.l.b16 %v361
      %v533 = vunpack.c.h.b16 %v361
      %v534 = vunpack.c.l.b16 %v362
      %v535 = vunpack.c.h.b16 %v362
      %v536 = vunpack.c.l.b16 %v363
      %v537 = vunpack.c.h.b16 %v363
      %v538 = vunpack.c.l.b16 %v364
      %v539 = vunpack.c.h.b16 %v364
      %v540 = vunpack.c.l.b16 %v365
      %v541 = vunpack.c.h.b16 %v365
      %v542 = vunpack.c.l.b16 %v366
      %v543 = vunpack.c.h.b16 %v366
      %v544 = vunpack.c.l.b16 %v367
      %v545 = vunpack.c.h.b16 %v367
      %v546 = vunpack.c.l.b16 %v368
      %v547 = vunpack.c.h.b16 %v368
      %v548 = vunpack.c.l.b16 %v369
      %v549 = vunpack.c.h.b16 %v369
      %v550 = vunpack.c.l.b16 %v370
      %v551 = vunpack.c.h.b16 %v370
      %v552 = vunpack.c.l.b16 %v371
      %v553 = vunpack.c.h.b16 %v371
      %v554 = vunpack.c.l.b16 %v372
      %v555 = vunpack.c.h.b16 %v372
      %v556 = vunpack.c.l.b16 %v373
      %v557 = vunpack.c.h.b16 %v373
      %v558 = vunpack.c.l.b16 %v374
      %v559 = vunpack.c.h.b16 %v374
      %v560 = vunpack.c.l.b16 %v375
      %v561 = vunpack.c.h.b16 %v375
      %v562 = vunpack.c.l.b16 %v376
      %v563 = vunpack.c.h.b16 %v376
      %v564 = vunpack.c.l.b16 %v377
      %v565 = vunpack.c.h.b16 %v377
      %v566 = vunpack.c.l.b16 %v378
      %v567 = vunpack.c.h.b16 %v378
      %v568 = vunpack.c.l.b16 %v379
      %v569 = vunpack.c.h.b16 %v379
      %v570 = vunpack.c.l.b16 %v380
      %v571 = vunpack.c.h.b16 %v380
      %v572 = vunpack.c.l.b16 %v381
      %v573 = vunpack.c.h.b16 %v381
      %v574 = vunpack.c.l.b16 %v382
      %v575 = vunpack.c.h.b16 %v382
      %v576 = vunpack.c.l.b16 %v383
      %v577 = vunpack.c.h.b16 %v383
      %v578 = vunpack.c.l.b16 %v384
      %v579 = vunpack.c.h.b16 %v384
      %v580 = vunpack.c.l.b16 %v385
      %v581 = vunpack.c.h.b16 %v385
      %v582 = vunpack.c.l.b16 %v386
      %v583 = vunpack.c.h.b16 %v386
      %v584 = vunpack.c.l.b16 %v387
      %v585 = vunpack.c.h.b16 %v387
      %v586 = vunpack.c.l.b16 %v388
      %v587 = vunpack.c.h.b16 %v388
      %v588 = vunpack.c.l.b16 %v389
      %v589 = vunpack.c.h.b16 %v389
      %v590 = vunpack.c.l.b16 %v390
      %v591 = vunpack.c.h.b16 %v390
      %v592 = vunpack.c.l.b16 %v391
      %v593 = vunpack.c.h.b16 %v391
      %v594 = vunpack.c.l.b16 %v392
      %v595 = vunpack.c.h.b16 %v392
      %v596 = vunpack.c.l.b16 %v393
      %v597 = vunpack.c.h.b16 %v393
      %v598 = vunpack.c.l.b16 %v394
      %v599 = vunpack.c.h.b16 %v394
      %v600 = vunpack.c.l.b16 %v395
      %v601 = vunpack.c.h.b16 %v395
      %v602 = vunpack.c.l.b16 %v396
      %v603 = vunpack.c.h.b16 %v396
      %v604 = vunpack.c.l.b16 %v397
      %v605 = vunpack.c.h.b16 %v397
      %v606 = vunpack.c.l.b16 %v398
      %v607 = vunpack.c.h.b16 %v398
      %v608 = vunpack.c.l.b16 %v399
      %v609 = vunpack.c.h.b16 %v399
      %v610 = vunpack.c.l.b16 %v400
      %v611 = vunpack.c.h.b16 %v400
      %v612 = vunpack.c.l.b16 %v401
      %v613 = vunpack.c.h.b16 %v401
      %v614 = vunpack.c.l.b16 %v402
      %v615 = vunpack.c.h.b16 %v402
      %v616 = vunpack.c.l.b16 %v403
      %v617 = vunpack.c.h.b16 %v403
      %v618 = vunpack.c.l.b16 %v404
      %v619 = vunpack.c.h.b16 %v404
      %v620 = vunpack.c.l.b16 %v405
      %v621 = vunpack.c.h.b16 %v405
      %v622 = vunpack.c.l.b16 %v406
      %v623 = vunpack.c.h.b16 %v406
      %v624 = vunpack.c.l.b16 %v407
      %v625 = vunpack.c.h.b16 %v407
      %v626 = vunpack.c.l.b16 %v408
      %v627 = vunpack.c.h.b16 %v408
      %v628 = vunpack.c.l.b16 %v409
      %v629 = vunpack.c.h.b16 %v409
      %v630 = vunpack.c.l.b16 %v410
      %v631 = vunpack.c.h.b16 %v410
      %v632 = vunpack.c.l.b16 %v411
      %v633 = vunpack.c.h.b16 %v411
      %v634 = vunpack.c.l.b16 %v412
      %v635 = vunpack.c.h.b16 %v412
      %v636 = vunpack.c.l.b16 %v413
      %v637 = vunpack.c.h.b16 %v413
      %v638 = vunpack.c.l.b16 %v414
      %v639 = vunpack.c.h.b16 %v414
      %v640 = vunpack.c.l.b16 %v415
      %v641 = vunpack.c.h.b16 %v415
      %v642 = vunpack.c.l.b16 %v416
      %v643 = vunpack.c.h.b16 %v416
      %v644 = vunpack.c.l.b16 %v417
      %v645 = vunpack.c.h.b16 %v417
      %v646 = vunpack.c.l.b16 %v418
      %v647 = vunpack.c.h.b16 %v418
      %v648 = vunpack.c.l.b16 %v419
      %v649 = vunpack.c.h.b16 %v419
      %v650 = vunpack.c.l.b16 %v420
      %v651 = vunpack.c.h.b16 %v420
      %v652 = vpack.c.b16 %v528, %v524
      %v653 = vpack.c.b16 %v529, %v525
      %v654 = vpack.c.b16 %v530, %v526
      %v655 = vpack.c.b16 %v531, %v527
      %v656 = vpack.c.b16 %v536, %v532
      %v657 = vpack.c.b16 %v537, %v533
      %v658 = vpack.c.b16 %v538, %v534
      %v659 = vpack.c.b16 %v539, %v535
      %v660 = vpack.c.b16 %v544, %v540
      %v661 = vpack.c.b16 %v545, %v541
      %v662 = vpack.c.b16 %v546, %v542
      %v663 = vpack.c.b16 %v547, %v543
      %v664 = vpack.c.b16 %v552, %v548
      %v665 = vpack.c.b16 %v553, %v549
      %v666 = vpack.c.b16 %v554, %v550
      %v667 = vpack.c.b16 %v555, %v551
      %v668 = vpack.c.b16 %v560, %v556
      %v669 = vpack.c.b16 %v561, %v557
      %v670 = vpack.c.b16 %v562, %v558
      %v671 = vpack.c.b16 %v563, %v559
      %v672 = vpack.c.b16 %v568, %v564
      %v673 = vpack.c.b16 %v569, %v565
      %v674 = vpack.c.b16 %v570, %v566
      %v675 = vpack.c.b16 %v571, %v567
      %v676 = vpack.c.b16 %v576, %v572
      %v677 = vpack.c.b16 %v577, %v573
      %v678 = vpack.c.b16 %v578, %v574
      %v679 = vpack.c.b16 %v579, %v575
      %v680 = vpack.c.b16 %v584, %v580
      %v681 = vpack.c.b16 %v585, %v581
      %v682 = vpack.c.b16 %v586, %v582
      %v683 = vpack.c.b16 %v587, %v583
      %v684 = vpack.c.b16 %v592, %v588
      %v685 = vpack.c.b16 %v593, %v589
      %v686 = vpack.c.b16 %v594, %v590
      %v687 = vpack.c.b16 %v595, %v591
      %v688 = vpack.c.b16 %v600, %v596
      %v689 = vpack.c.b16 %v601, %v597
      %v690 = vpack.c.b16 %v602, %v598
      %v691 = vpack.c.b16 %v603, %v599
      %v692 = vpack.c.b16 %v608, %v604
      %v693 = vpack.c.b16 %v609, %v605
      %v694 = vpack.c.b16 %v610, %v606
      %v695 = vpack.c.b16 %v611, %v607
      %v696 = vpack.c.b16 %v616, %v612
      %v697 = vpack.c.b16 %v617, %v613
      %v698 = vpack.c.b16 %v618, %v614
      %v699 = vpack.c.b16 %v619, %v615
      %v700 = vpack.c.b16 %v624, %v620
      %v701 = vpack.c.b16 %v625, %v621
      %v702 = vpack.c.b16 %v626, %v622
      %v703 = vpack.c.b16 %v627, %v623
      %v704 = vpack.c.b16 %v632, %v628
      %v705 = vpack.c.b16 %v633, %v629
      %v706 = vpack.c.b16 %v634, %v630
      %v707 = vpack.c.b16 %v635, %v631
      %v708 = vpack.c.b16 %v640, %v636
      %v709 = vpack.c.b16 %v641, %v637
      %v710 = vpack.c.b16 %v642, %v638
      %v711 = vpack.c.b16 %v643, %v639
      %v712 = vpack.c.b16 %v648, %v644
      %v713 = vpack.c.b16 %v649, %v645
      %v714 = vpack.c.b16 %v650, %v646
      %v715 = vpack.c.b16 %v651, %v647
      %780 = vmatprep.subr.bf16.mxu0 %v681
      %781 = vmatpush1.bf16.msra.mxu0 %v680
      %782 = vmatprep.subr.bf16.mxu0 %v677
      %783 = vmatpush1.bf16.msra.mxu0 %v676
      %784 = vmatprep.subr.bf16.mxu0 %v673
      %785 = vmatpush1.bf16.msra.mxu0 %v672
      %786 = vmatprep.subr.bf16.mxu0 %v669
      %787 = vmatpush1.bf16.msra.mxu0 %v668
      %788 = vmatprep.subr.bf16.mxu0 %v665
      %789 = vmatpush1.bf16.msra.mxu0 %v664
      %790 = vmatprep.subr.bf16.mxu0 %v661
      %791 = vmatpush1.bf16.msra.mxu0 %v660
      %792 = vmatprep.subr.bf16.mxu0 %v657
      %793 = vmatpush1.bf16.msra.mxu0 %v656
      %794 = vmatprep.subr.bf16.mxu0 %v653
      %795 = vmatpush1.bf16.msra.mxu0 %v652
      %796 = vmatprep.subr.bf16.mxu0 %v713
      %797 = vmatpush2.bf16.msra.mxu0 %v712
      %798 = vmatprep.subr.bf16.mxu0 %v709
      %799 = vmatpush2.bf16.msra.mxu0 %v708
      %800 = vmatprep.subr.bf16.mxu0 %v705
      %801 = vmatpush2.bf16.msra.mxu0 %v704
      %802 = vmatprep.subr.bf16.mxu0 %v701
      %803 = vmatpush2.bf16.msra.mxu0 %v700
      %804 = vmatprep.subr.bf16.mxu0 %v697
      %805 = vmatpush2.bf16.msra.mxu0 %v696
      %806 = vmatprep.subr.bf16.mxu0 %v693
      %807 = vmatpush2.bf16.msra.mxu0 %v692
      %808 = vmatprep.subr.bf16.mxu0 %v689
      %809 = vmatpush2.bf16.msra.mxu0 %v688
      %810 = vmatprep.subr.bf16.mxu0 %v685
      %811 = vmatpush2.bf16.msra.mxu0 %v684
      %812 = vmatprep.mubr.bf16.mxu0 %v356
      %813 = vmatmul.mubr.bf16.gmra.mxu0 %v355
      %v814 = vpop.f32.mrf.mxu0
      %v815 = vadd.f32 %v447, %v814
      %v816 = vpop.f32.mrf.mxu0
      %v817 = vadd.f32 %v451, %v816
      %v818 = vpop.f32.mrf.mxu0
      %v819 = vpop.f32.mrf.mxu0
      %820 = vdwg.mxu0
      %821 = vmatprep.subr.bf16.mxu0 %v683
      %822 = vmatpush1.bf16.msra.mxu0 %v682
      %823 = vmatprep.subr.bf16.mxu0 %v679
      %824 = vmatpush1.bf16.msra.mxu0 %v678
      %825 = vmatprep.subr.bf16.mxu0 %v675
      %826 = vmatpush1.bf16.msra.mxu0 %v674
      %827 = vmatprep.subr.bf16.mxu0 %v671
      %828 = vmatpush1.bf16.msra.mxu0 %v670
      %829 = vmatprep.subr.bf16.mxu0 %v667
      %830 = vmatpush1.bf16.msra.mxu0 %v666
      %831 = vmatprep.subr.bf16.mxu0 %v663
      %832 = vmatpush1.bf16.msra.mxu0 %v662
      %833 = vmatprep.subr.bf16.mxu0 %v659
      %834 = vmatpush1.bf16.msra.mxu0 %v658
      %835 = vmatprep.subr.bf16.mxu0 %v655
      %836 = vmatpush1.bf16.msra.mxu0 %v654
      %837 = vmatprep.subr.bf16.mxu0 %v715
      %838 = vmatpush2.bf16.msra.mxu0 %v714
      %839 = vmatprep.subr.bf16.mxu0 %v711
      %840 = vmatpush2.bf16.msra.mxu0 %v710
      %841 = vmatprep.subr.bf16.mxu0 %v707
      %842 = vmatpush2.bf16.msra.mxu0 %v706
      %843 = vmatprep.subr.bf16.mxu0 %v703
      %844 = vmatpush2.bf16.msra.mxu0 %v702
      %845 = vmatprep.subr.bf16.mxu0 %v699
      %846 = vmatpush2.bf16.msra.mxu0 %v698
      %847 = vmatprep.subr.bf16.mxu0 %v695
      %848 = vmatpush2.bf16.msra.mxu0 %v694
      %849 = vmatprep.subr.bf16.mxu0 %v691
      %850 = vmatpush2.bf16.msra.mxu0 %v690
      %851 = vmatprep.subr.bf16.mxu0 %v687
      %852 = vmatpush2.bf16.msra.mxu0 %v686
      %853 = vmatprep.mubr.bf16.mxu0 %v356
      %854 = vmatmul.mubr.bf16.gmra.mxu0 %v355
      %v855 = vpop.f32.mrf.mxu0
      %v856 = vadd.f32 %v455, %v855
      %v857 = vpop.f32.mrf.mxu0
      %v858 = vadd.f32 %v459, %v857
      %v859 = vpop.f32.mrf.mxu0
      %v860 = vpop.f32.mrf.mxu0
      %861 = vdwg.mxu0
      %v862 = vmax.f32 %v815, 0.0
      %v863 = vmax.f32 %v817, 0.0
      %v864 = vmax.f32 %v856, 0.0
      %v865 = vmax.f32 %v858, 0.0
      %v866 = vpack.c.bf16 %v862, %v862
      %v867 = vpack.c.bf16 %v863, %v863
      %v868 = vpack.c.bf16 %v864, %v864
      %v869 = vpack.c.bf16 %v865, %v865
      %v870 = vld [vmem:[#allocation9] sm:$0xff]
      %v871 = vld [vmem:[#allocation9 + $0x8] sm:$0xff]
      %v872 = vld [vmem:[#allocation9 + $0x10] sm:$0xff]
      %v873 = vld [vmem:[#allocation9 + $0x18] sm:$0xff]
      %v874 = vld [vmem:[#allocation9 + $0x20] sm:$0xff]
      %v875 = vld [vmem:[#allocation9 + $0x28] sm:$0xff]
      %v876 = vld [vmem:[#allocation9 + $0x30] sm:$0xff]
      %v877 = vld [vmem:[#allocation9 + $0x38] sm:$0xff]
      %v878 = vld [vmem:[#allocation9 + $0x40] sm:$0xff]
      %v879 = vld [vmem:[#allocation9 + $0x48] sm:$0xff]
      %v880 = vld [vmem:[#allocation9 + $0x50] sm:$0xff]
      %v881 = vld [vmem:[#allocation9 + $0x58] sm:$0xff]
      %v882 = vld [vmem:[#allocation9 + $0x60] sm:$0xff]
      %v883 = vld [vmem:[#allocation9 + $0x68] sm:$0xff]
      %v884 = vld [vmem:[#allocation9 + $0x70] sm:$0xff]
      %v885 = vld [vmem:[#allocation9 + $0x78] sm:$0xff]
      %v886 = vld [vmem:[#allocation9 + $0x80] sm:$0xff]
      %v887 = vld [vmem:[#allocation9 + $0x88] sm:$0xff]
      %v888 = vld [vmem:[#allocation9 + $0x90] sm:$0xff]
      %v889 = vld [vmem:[#allocation9 + $0x98] sm:$0xff]
      %v890 = vld [vmem:[#allocation9 + $0xa0] sm:$0xff]
      %v891 = vld [vmem:[#allocation9 + $0xa8] sm:$0xff]
      %v892 = vld [vmem:[#allocation9 + $0xb0] sm:$0xff]
      %v893 = vld [vmem:[#allocation9 + $0xb8] sm:$0xff]
      %v894 = vld [vmem:[#allocation9 + $0xc0] sm:$0xff]
      %v895 = vld [vmem:[#allocation9 + $0xc8] sm:$0xff]
      %v896 = vld [vmem:[#allocation9 + $0xd0] sm:$0xff]
      %v897 = vld [vmem:[#allocation9 + $0xd8] sm:$0xff]
      %v898 = vld [vmem:[#allocation9 + $0xe0] sm:$0xff]
      %v899 = vld [vmem:[#allocation9 + $0xe8] sm:$0xff]
      %v900 = vld [vmem:[#allocation9 + $0xf0] sm:$0xff]
      %v901 = vld [vmem:[#allocation9 + $0xf8] sm:$0xff]
      %v902 = vld [vmem:[#allocation9 + $0x100] sm:$0xff]
      %v903 = vld [vmem:[#allocation9 + $0x108] sm:$0xff]
      %v904 = vld [vmem:[#allocation9 + $0x110] sm:$0xff]
      %v905 = vld [vmem:[#allocation9 + $0x118] sm:$0xff]
      %v906 = vld [vmem:[#allocation9 + $0x120] sm:$0xff]
      %v907 = vld [vmem:[#allocation9 + $0x128] sm:$0xff]
      %v908 = vld [vmem:[#allocation9 + $0x130] sm:$0xff]
      %v909 = vld [vmem:[#allocation9 + $0x138] sm:$0xff]
      %v910 = vld [vmem:[#allocation9 + $0x140] sm:$0xff]
      %v911 = vld [vmem:[#allocation9 + $0x148] sm:$0xff]
      %v912 = vld [vmem:[#allocation9 + $0x150] sm:$0xff]
      %v913 = vld [vmem:[#allocation9 + $0x158] sm:$0xff]
      %v914 = vld [vmem:[#allocation9 + $0x160] sm:$0xff]
      %v915 = vld [vmem:[#allocation9 + $0x168] sm:$0xff]
      %v916 = vld [vmem:[#allocation9 + $0x170] sm:$0xff]
      %v917 = vld [vmem:[#allocation9 + $0x178] sm:$0xff]
      %v918 = vld [vmem:[#allocation9 + $0x180] sm:$0xff]
      %v919 = vld [vmem:[#allocation9 + $0x188] sm:$0xff]
      %v920 = vld [vmem:[#allocation9 + $0x190] sm:$0xff]
      %v921 = vld [vmem:[#allocation9 + $0x198] sm:$0xff]
      %v922 = vld [vmem:[#allocation9 + $0x1a0] sm:$0xff]
      %v923 = vld [vmem:[#allocation9 + $0x1a8] sm:$0xff]
      %v924 = vld [vmem:[#allocation9 + $0x1b0] sm:$0xff]
      %v925 = vld [vmem:[#allocation9 + $0x1b8] sm:$0xff]
      %v926 = vld [vmem:[#allocation9 + $0x1c0] sm:$0xff]
      %v927 = vld [vmem:[#allocation9 + $0x1c8] sm:$0xff]
      %v928 = vld [vmem:[#allocation9 + $0x1d0] sm:$0xff]
      %v929 = vld [vmem:[#allocation9 + $0x1d8] sm:$0xff]
      %v930 = vld [vmem:[#allocation9 + $0x1e0] sm:$0xff]
      %v931 = vld [vmem:[#allocation9 + $0x1e8] sm:$0xff]
      %v932 = vld [vmem:[#allocation9 + $0x1f0] sm:$0xff]
      %v933 = vld [vmem:[#allocation9 + $0x1f8] sm:$0xff]
      %v934 = vld [vmem:[%s4] sm:$0x3]
      %v935 = vunpack.c.l.bf16 %v934
      %v937 = vlaneseq
      %v938 = vshrl.u32 %v937, 7
      %v939 = vsub.s32 0, %v938
      %v940 = vrot.slane %v935, %v939
      %v941 = vlaneseq
      %v942 = vshrl.u32 %v941, 7
      %v943 = vsub.s32 2, %v942
      %v944 = vrot.slane %v935, %v943
      %v947 = vlaneseq
      %v948 = vshrl.u32 %v947, 7
      %v949 = vsub.s32 0, %v948
      %v950 = vrot.slane %v940, %v949
      %v951 = vlaneseq
      %v952 = vshrl.u32 %v951, 7
      %v953 = vsub.s32 0, %v952
      %v954 = vrot.slane %v944, %v953
      %v1019 = vunpack.c.l.b16 %v870
      %v1020 = vunpack.c.h.b16 %v870
      %v1021 = vunpack.c.l.b16 %v871
      %v1022 = vunpack.c.h.b16 %v871
      %v1023 = vunpack.c.l.b16 %v872
      %v1024 = vunpack.c.h.b16 %v872
      %v1025 = vunpack.c.l.b16 %v873
      %v1026 = vunpack.c.h.b16 %v873
      %v1027 = vunpack.c.l.b16 %v874
      %v1028 = vunpack.c.h.b16 %v874
      %v1029 = vunpack.c.l.b16 %v875
      %v1030 = vunpack.c.h.b16 %v875
      %v1031 = vunpack.c.l.b16 %v876
      %v1032 = vunpack.c.h.b16 %v876
      %v1033 = vunpack.c.l.b16 %v877
      %v1034 = vunpack.c.h.b16 %v877
      %v1035 = vunpack.c.l.b16 %v878
      %v1036 = vunpack.c.h.b16 %v878
      %v1037 = vunpack.c.l.b16 %v879
      %v1038 = vunpack.c.h.b16 %v879
      %v1039 = vunpack.c.l.b16 %v880
      %v1040 = vunpack.c.h.b16 %v880
      %v1041 = vunpack.c.l.b16 %v881
      %v1042 = vunpack.c.h.b16 %v881
      %v1043 = vunpack.c.l.b16 %v882
      %v1044 = vunpack.c.h.b16 %v882
      %v1045 = vunpack.c.l.b16 %v883
      %v1046 = vunpack.c.h.b16 %v883
      %v1047 = vunpack.c.l.b16 %v884
      %v1048 = vunpack.c.h.b16 %v884
      %v1049 = vunpack.c.l.b16 %v885
      %v1050 = vunpack.c.h.b16 %v885
      %v1051 = vunpack.c.l.b16 %v886
      %v1052 = vunpack.c.h.b16 %v886
      %v1053 = vunpack.c.l.b16 %v887
      %v1054 = vunpack.c.h.b16 %v887
      %v1055 = vunpack.c.l.b16 %v888
      %v1056 = vunpack.c.h.b16 %v888
      %v1057 = vunpack.c.l.b16 %v889
      %v1058 = vunpack.c.h.b16 %v889
      %v1059 = vunpack.c.l.b16 %v890
      %v1060 = vunpack.c.h.b16 %v890
      %v1061 = vunpack.c.l.b16 %v891
      %v1062 = vunpack.c.h.b16 %v891
      %v1063 = vunpack.c.l.b16 %v892
      %v1064 = vunpack.c.h.b16 %v892
      %v1065 = vunpack.c.l.b16 %v893
      %v1066 = vunpack.c.h.b16 %v893
      %v1067 = vunpack.c.l.b16 %v894
      %v1068 = vunpack.c.h.b16 %v894
      %v1069 = vunpack.c.l.b16 %v895
      %v1070 = vunpack.c.h.b16 %v895
      %v1071 = vunpack.c.l.b16 %v896
      %v1072 = vunpack.c.h.b16 %v896
      %v1073 = vunpack.c.l.b16 %v897
      %v1074 = vunpack.c.h.b16 %v897
      %v1075 = vunpack.c.l.b16 %v898
      %v1076 = vunpack.c.h.b16 %v898
      %v1077 = vunpack.c.l.b16 %v899
      %v1078 = vunpack.c.h.b16 %v899
      %v1079 = vunpack.c.l.b16 %v900
      %v1080 = vunpack.c.h.b16 %v900
      %v1081 = vunpack.c.l.b16 %v901
      %v1082 = vunpack.c.h.b16 %v901
      %v1083 = vunpack.c.l.b16 %v902
      %v1084 = vunpack.c.h.b16 %v902
      %v1085 = vunpack.c.l.b16 %v903
      %v1086 = vunpack.c.h.b16 %v903
      %v1087 = vunpack.c.l.b16 %v904
      %v1088 = vunpack.c.h.b16 %v904
      %v1089 = vunpack.c.l.b16 %v905
      %v1090 = vunpack.c.h.b16 %v905
      %v1091 = vunpack.c.l.b16 %v906
      %v1092 = vunpack.c.h.b16 %v906
      %v1093 = vunpack.c.l.b16 %v907
      %v1094 = vunpack.c.h.b16 %v907
      %v1095 = vunpack.c.l.b16 %v908
      %v1096 = vunpack.c.h.b16 %v908
      %v1097 = vunpack.c.l.b16 %v909
      %v1098 = vunpack.c.h.b16 %v909
      %v1099 = vunpack.c.l.b16 %v910
      %v1100 = vunpack.c.h.b16 %v910
      %v1101 = vunpack.c.l.b16 %v911
      %v1102 = vunpack.c.h.b16 %v911
      %v1103 = vunpack.c.l.b16 %v912
      %v1104 = vunpack.c.h.b16 %v912
      %v1105 = vunpack.c.l.b16 %v913
      %v1106 = vunpack.c.h.b16 %v913
      %v1107 = vunpack.c.l.b16 %v914
      %v1108 = vunpack.c.h.b16 %v914
      %v1109 = vunpack.c.l.b16 %v915
      %v1110 = vunpack.c.h.b16 %v915
      %v1111 = vunpack.c.l.b16 %v916
      %v1112 = vunpack.c.h.b16 %v916
      %v1113 = vunpack.c.l.b16 %v917
      %v1114 = vunpack.c.h.b16 %v917
      %v1115 = vunpack.c.l.b16 %v918
      %v1116 = vunpack.c.h.b16 %v918
      %v1117 = vunpack.c.l.b16 %v919
      %v1118 = vunpack.c.h.b16 %v919
      %v1119 = vunpack.c.l.b16 %v920
      %v1120 = vunpack.c.h.b16 %v920
      %v1121 = vunpack.c.l.b16 %v921
      %v1122 = vunpack.c.h.b16 %v921
      %v1123 = vunpack.c.l.b16 %v922
      %v1124 = vunpack.c.h.b16 %v922
      %v1125 = vunpack.c.l.b16 %v923
      %v1126 = vunpack.c.h.b16 %v923
      %v1127 = vunpack.c.l.b16 %v924
      %v1128 = vunpack.c.h.b16 %v924
      %v1129 = vunpack.c.l.b16 %v925
      %v1130 = vunpack.c.h.b16 %v925
      %v1131 = vunpack.c.l.b16 %v926
      %v1132 = vunpack.c.h.b16 %v926
      %v1133 = vunpack.c.l.b16 %v927
      %v1134 = vunpack.c.h.b16 %v927
      %v1135 = vunpack.c.l.b16 %v928
      %v1136 = vunpack.c.h.b16 %v928
      %v1137 = vunpack.c.l.b16 %v929
      %v1138 = vunpack.c.h.b16 %v929
      %v1139 = vunpack.c.l.b16 %v930
      %v1140 = vunpack.c.h.b16 %v930
      %v1141 = vunpack.c.l.b16 %v931
      %v1142 = vunpack.c.h.b16 %v931
      %v1143 = vunpack.c.l.b16 %v932
      %v1144 = vunpack.c.h.b16 %v932
      %v1145 = vunpack.c.l.b16 %v933
      %v1146 = vunpack.c.h.b16 %v933
      %v1147 = vpack.c.b16 %v1021, %v1019
      %v1148 = vpack.c.b16 %v1022, %v1020
      %v1149 = vpack.c.b16 %v1025, %v1023
      %v1150 = vpack.c.b16 %v1026, %v1024
      %v1151 = vpack.c.b16 %v1029, %v1027
      %v1152 = vpack.c.b16 %v1030, %v1028
      %v1153 = vpack.c.b16 %v1033, %v1031
      %v1154 = vpack.c.b16 %v1034, %v1032
      %v1155 = vpack.c.b16 %v1037, %v1035
      %v1156 = vpack.c.b16 %v1038, %v1036
      %v1157 = vpack.c.b16 %v1041, %v1039
      %v1158 = vpack.c.b16 %v1042, %v1040
      %v1159 = vpack.c.b16 %v1045, %v1043
      %v1160 = vpack.c.b16 %v1046, %v1044
      %v1161 = vpack.c.b16 %v1049, %v1047
      %v1162 = vpack.c.b16 %v1050, %v1048
      %v1163 = vpack.c.b16 %v1053, %v1051
      %v1164 = vpack.c.b16 %v1054, %v1052
      %v1165 = vpack.c.b16 %v1057, %v1055
      %v1166 = vpack.c.b16 %v1058, %v1056
      %v1167 = vpack.c.b16 %v1061, %v1059
      %v1168 = vpack.c.b16 %v1062, %v1060
      %v1169 = vpack.c.b16 %v1065, %v1063
      %v1170 = vpack.c.b16 %v1066, %v1064
      %v1171 = vpack.c.b16 %v1069, %v1067
      %v1172 = vpack.c.b16 %v1070, %v1068
      %v1173 = vpack.c.b16 %v1073, %v1071
      %v1174 = vpack.c.b16 %v1074, %v1072
      %v1175 = vpack.c.b16 %v1077, %v1075
      %v1176 = vpack.c.b16 %v1078, %v1076
      %v1177 = vpack.c.b16 %v1081, %v1079
      %v1178 = vpack.c.b16 %v1082, %v1080
      %v1179 = vpack.c.b16 %v1085, %v1083
      %v1180 = vpack.c.b16 %v1086, %v1084
      %v1181 = vpack.c.b16 %v1089, %v1087
      %v1182 = vpack.c.b16 %v1090, %v1088
      %v1183 = vpack.c.b16 %v1093, %v1091
      %v1184 = vpack.c.b16 %v1094, %v1092
      %v1185 = vpack.c.b16 %v1097, %v1095
      %v1186 = vpack.c.b16 %v1098, %v1096
      %v1187 = vpack.c.b16 %v1101, %v1099
      %v1188 = vpack.c.b16 %v1102, %v1100
      %v1189 = vpack.c.b16 %v1105, %v1103
      %v1190 = vpack.c.b16 %v1106, %v1104
      %v1191 = vpack.c.b16 %v1109, %v1107
      %v1192 = vpack.c.b16 %v1110, %v1108
      %v1193 = vpack.c.b16 %v1113, %v1111
      %v1194 = vpack.c.b16 %v1114, %v1112
      %v1195 = vpack.c.b16 %v1117, %v1115
      %v1196 = vpack.c.b16 %v1118, %v1116
      %v1197 = vpack.c.b16 %v1121, %v1119
      %v1198 = vpack.c.b16 %v1122, %v1120
      %v1199 = vpack.c.b16 %v1125, %v1123
      %v1200 = vpack.c.b16 %v1126, %v1124
      %v1201 = vpack.c.b16 %v1129, %v1127
      %v1202 = vpack.c.b16 %v1130, %v1128
      %v1203 = vpack.c.b16 %v1133, %v1131
      %v1204 = vpack.c.b16 %v1134, %v1132
      %v1205 = vpack.c.b16 %v1137, %v1135
      %v1206 = vpack.c.b16 %v1138, %v1136
      %v1207 = vpack.c.b16 %v1141, %v1139
      %v1208 = vpack.c.b16 %v1142, %v1140
      %v1209 = vpack.c.b16 %v1145, %v1143
      %v1210 = vpack.c.b16 %v1146, %v1144
      %1275 = vmatprep.subr.bf16.mxu0 %v1162
      %1276 = vmatpush1.bf16.msra.mxu0 %v1161
      %1277 = vmatprep.subr.bf16.mxu0 %v1160
      %1278 = vmatpush1.bf16.msra.mxu0 %v1159
      %1279 = vmatprep.subr.bf16.mxu0 %v1158
      %1280 = vmatpush1.bf16.msra.mxu0 %v1157
      %1281 = vmatprep.subr.bf16.mxu0 %v1156
      %1282 = vmatpush1.bf16.msra.mxu0 %v1155
      %1283 = vmatprep.subr.bf16.mxu0 %v1154
      %1284 = vmatpush1.bf16.msra.mxu0 %v1153
      %1285 = vmatprep.subr.bf16.mxu0 %v1152
      %1286 = vmatpush1.bf16.msra.mxu0 %v1151
      %1287 = vmatprep.subr.bf16.mxu0 %v1150
      %1288 = vmatpush1.bf16.msra.mxu0 %v1149
      %1289 = vmatprep.subr.bf16.mxu0 %v1148
      %1290 = vmatpush1.bf16.msra.mxu0 %v1147
      %1291 = vmatprep.subr.bf16.mxu0 %v1178
      %1292 = vmatpush2.bf16.msra.mxu0 %v1177
      %1293 = vmatprep.subr.bf16.mxu0 %v1176
      %1294 = vmatpush2.bf16.msra.mxu0 %v1175
      %1295 = vmatprep.subr.bf16.mxu0 %v1174
      %1296 = vmatpush2.bf16.msra.mxu0 %v1173
      %1297 = vmatprep.subr.bf16.mxu0 %v1172
      %1298 = vmatpush2.bf16.msra.mxu0 %v1171
      %1299 = vmatprep.subr.bf16.mxu0 %v1170
      %1300 = vmatpush2.bf16.msra.mxu0 %v1169
      %1301 = vmatprep.subr.bf16.mxu0 %v1168
      %1302 = vmatpush2.bf16.msra.mxu0 %v1167
      %1303 = vmatprep.subr.bf16.mxu0 %v1166
      %1304 = vmatpush2.bf16.msra.mxu0 %v1165
      %1305 = vmatprep.subr.bf16.mxu0 %v1164
      %1306 = vmatpush2.bf16.msra.mxu0 %v1163
      %1307 = vmatprep.mubr.bf16.mxu0 %v867
      %1308 = vmatmul.mubr.bf16.gmra.mxu0 %v866
      %v1309 = vpop.f32.mrf.mxu0
      %v1310 = vadd.f32 %v950, %v1309
      %v1311 = vpop.f32.mrf.mxu0
      %v1312 = vadd.f32 %v954, %v1311
      %v1313 = vpop.f32.mrf.mxu0
      %v1314 = vpop.f32.mrf.mxu0
      %1315 = vdwg.mxu0
      %1316 = vmatprep.subr.bf16.mxu0 %v1194
      %1317 = vmatpush1.bf16.msra.mxu0 %v1193
      %1318 = vmatprep.subr.bf16.mxu0 %v1192
      %1319 = vmatpush1.bf16.msra.mxu0 %v1191
      %1320 = vmatprep.subr.bf16.mxu0 %v1190
      %1321 = vmatpush1.bf16.msra.mxu0 %v1189
      %1322 = vmatprep.subr.bf16.mxu0 %v1188
      %1323 = vmatpush1.bf16.msra.mxu0 %v1187
      %1324 = vmatprep.subr.bf16.mxu0 %v1186
      %1325 = vmatpush1.bf16.msra.mxu0 %v1185
      %1326 = vmatprep.subr.bf16.mxu0 %v1184
      %1327 = vmatpush1.bf16.msra.mxu0 %v1183
      %1328 = vmatprep.subr.bf16.mxu0 %v1182
      %1329 = vmatpush1.bf16.msra.mxu0 %v1181
      %1330 = vmatprep.subr.bf16.mxu0 %v1180
      %1331 = vmatpush1.bf16.msra.mxu0 %v1179
      %1332 = vmatprep.subr.bf16.mxu0 %v1210
      %1333 = vmatpush2.bf16.msra.mxu0 %v1209
      %1334 = vmatprep.subr.bf16.mxu0 %v1208
      %1335 = vmatpush2.bf16.msra.mxu0 %v1207
      %1336 = vmatprep.subr.bf16.mxu0 %v1206
      %1337 = vmatpush2.bf16.msra.mxu0 %v1205
      %1338 = vmatprep.subr.bf16.mxu0 %v1204
      %1339 = vmatpush2.bf16.msra.mxu0 %v1203
      %1340 = vmatprep.subr.bf16.mxu0 %v1202
      %1341 = vmatpush2.bf16.msra.mxu0 %v1201
      %1342 = vmatprep.subr.bf16.mxu0 %v1200
      %1343 = vmatpush2.bf16.msra.mxu0 %v1199
      %1344 = vmatprep.subr.bf16.mxu0 %v1198
      %1345 = vmatpush2.bf16.msra.mxu0 %v1197
      %1346 = vmatprep.subr.bf16.mxu0 %v1196
      %1347 = vmatpush2.bf16.msra.mxu0 %v1195
      %1348 = vmatprep.mubr.bf16.mxu0 %v869
      %1349 = vmatmul.mubr.bf16.gmra.mxu0 %v868
      %v1350 = vpop.f32.mrf.mxu0
      %v1351 = vadd.f32 %v1310, %v1350
      %v1352 = vpop.f32.mrf.mxu0
      %v1353 = vadd.f32 %v1312, %v1352
      %v1354 = vpop.f32.mrf.mxu0
      %v1355 = vpop.f32.mrf.mxu0
      %1356 = vdwg.mxu0
      %v1357 = vmax.f32 %v1351, 0.0
      %v1358 = vmax.f32 %v1353, 0.0
      %v1359 = vpack.c.bf16 %v1357, %v1357
      %v1360 = vpack.c.bf16 %v1358, %v1358
      %v1361 = vld [vmem:[#allocation11] sm:$0xf]
      %v1362 = vld [vmem:[#allocation11 + $0x4] sm:$0xf]
      %v1363 = vld [vmem:[#allocation11 + $0x8] sm:$0xf]
      %v1364 = vld [vmem:[#allocation11 + $0xc] sm:$0xf]
      %v1365 = vld [vmem:[#allocation11 + $0x10] sm:$0xf]
      %v1366 = vld [vmem:[#allocation11 + $0x14] sm:$0xf]
      %v1367 = vld [vmem:[#allocation11 + $0x18] sm:$0xf]
      %v1368 = vld [vmem:[#allocation11 + $0x1c] sm:$0xf]
      %v1369 = vld [vmem:[#allocation11 + $0x20] sm:$0xf]
      %v1370 = vld [vmem:[#allocation11 + $0x24] sm:$0xf]
      %v1371 = vld [vmem:[#allocation11 + $0x28] sm:$0xf]
      %v1372 = vld [vmem:[#allocation11 + $0x2c] sm:$0xf]
      %v1373 = vld [vmem:[#allocation11 + $0x30] sm:$0xf]
      %v1374 = vld [vmem:[#allocation11 + $0x34] sm:$0xf]
      %v1375 = vld [vmem:[#allocation11 + $0x38] sm:$0xf]
      %v1376 = vld [vmem:[#allocation11 + $0x3c] sm:$0xf]
      %v1377 = vld [vmem:[#allocation11 + $0x40] sm:$0xf]
      %v1378 = vld [vmem:[#allocation11 + $0x44] sm:$0xf]
      %v1379 = vld [vmem:[#allocation11 + $0x48] sm:$0xf]
      %v1380 = vld [vmem:[#allocation11 + $0x4c] sm:$0xf]
      %v1381 = vld [vmem:[#allocation11 + $0x50] sm:$0xf]
      %v1382 = vld [vmem:[#allocation11 + $0x54] sm:$0xf]
      %v1383 = vld [vmem:[#allocation11 + $0x58] sm:$0xf]
      %v1384 = vld [vmem:[#allocation11 + $0x5c] sm:$0xf]
      %v1385 = vld [vmem:[#allocation11 + $0x60] sm:$0xf]
      %v1386 = vld [vmem:[#allocation11 + $0x64] sm:$0xf]
      %v1387 = vld [vmem:[#allocation11 + $0x68] sm:$0xf]
      %v1388 = vld [vmem:[#allocation11 + $0x6c] sm:$0xf]
      %v1389 = vld [vmem:[#allocation11 + $0x70] sm:$0xf]
      %v1390 = vld [vmem:[#allocation11 + $0x74] sm:$0xf]
      %v1391 = vld [vmem:[#allocation11 + $0x78] sm:$0xf]
      %v1392 = vld [vmem:[#allocation11 + $0x7c] sm:$0xf]
      %v1393 = vld [vmem:[%s6] sm:$0x1]
      %v1394 = vunpack.c.l.bf16 %v1393
      %v1395 = vlaneseq
      %v1396 = vshrl.u32 %v1395, 7
      %v1397 = vsub.s32 0, %v1396
      %v1398 = vrot.slane %v1394, %v1397
      %v1431 = vunpack.c.l.b16 %v1361
      %v1432 = vunpack.c.l.b16 %v1362
      %v1433 = vunpack.c.l.b16 %v1363
      %v1434 = vunpack.c.l.b16 %v1364
      %v1435 = vunpack.c.l.b16 %v1365
      %v1436 = vunpack.c.l.b16 %v1366
      %v1437 = vunpack.c.l.b16 %v1367
      %v1438 = vunpack.c.l.b16 %v1368
      %v1439 = vunpack.c.l.b16 %v1369
      %v1440 = vunpack.c.l.b16 %v1370
      %v1441 = vunpack.c.l.b16 %v1371
      %v1442 = vunpack.c.l.b16 %v1372
      %v1443 = vunpack.c.l.b16 %v1373
      %v1444 = vunpack.c.l.b16 %v1374
      %v1445 = vunpack.c.l.b16 %v1375
      %v1446 = vunpack.c.l.b16 %v1376
      %v1447 = vunpack.c.l.b16 %v1377
      %v1448 = vunpack.c.l.b16 %v1378
      %v1449 = vunpack.c.l.b16 %v1379
      %v1450 = vunpack.c.l.b16 %v1380
      %v1451 = vunpack.c.l.b16 %v1381
      %v1452 = vunpack.c.l.b16 %v1382
      %v1453 = vunpack.c.l.b16 %v1383
      %v1454 = vunpack.c.l.b16 %v1384
      %v1455 = vunpack.c.l.b16 %v1385
      %v1456 = vunpack.c.l.b16 %v1386
      %v1457 = vunpack.c.l.b16 %v1387
      %v1458 = vunpack.c.l.b16 %v1388
      %v1459 = vunpack.c.l.b16 %v1389
      %v1460 = vunpack.c.l.b16 %v1390
      %v1461 = vunpack.c.l.b16 %v1391
      %v1462 = vunpack.c.l.b16 %v1392
      %v1463 = vpack.c.b16 %v1432, %v1431
      %v1464 = vpack.c.b16 %v1434, %v1433
      %v1465 = vpack.c.b16 %v1436, %v1435
      %v1466 = vpack.c.b16 %v1438, %v1437
      %v1467 = vpack.c.b16 %v1440, %v1439
      %v1468 = vpack.c.b16 %v1442, %v1441
      %v1469 = vpack.c.b16 %v1444, %v1443
      %v1470 = vpack.c.b16 %v1446, %v1445
      %v1471 = vpack.c.b16 %v1448, %v1447
      %v1472 = vpack.c.b16 %v1450, %v1449
      %v1473 = vpack.c.b16 %v1452, %v1451
      %v1474 = vpack.c.b16 %v1454, %v1453
      %v1475 = vpack.c.b16 %v1456, %v1455
      %v1476 = vpack.c.b16 %v1458, %v1457
      %v1477 = vpack.c.b16 %v1460, %v1459
      %v1478 = vpack.c.b16 %v1462, %v1461
      %1495 = vmatprep.subr.bf16.mxu0 0
      %1496 = vmatpush1.bf16.msra.mxu0 %v1470
      %1497 = vmatprep.subr.bf16.mxu0 0
      %1498 = vmatpush1.bf16.msra.mxu0 %v1469
      %1499 = vmatprep.subr.bf16.mxu0 0
      %1500 = vmatpush1.bf16.msra.mxu0 %v1468
      %1501 = vmatprep.subr.bf16.mxu0 0
      %1502 = vmatpush1.bf16.msra.mxu0 %v1467
      %1503 = vmatprep.subr.bf16.mxu0 0
      %1504 = vmatpush1.bf16.msra.mxu0 %v1466
      %1505 = vmatprep.subr.bf16.mxu0 0
      %1506 = vmatpush1.bf16.msra.mxu0 %v1465
      %1507 = vmatprep.subr.bf16.mxu0 0
      %1508 = vmatpush1.bf16.msra.mxu0 %v1464
      %1509 = vmatprep.subr.bf16.mxu0 0
      %1510 = vmatpush1.bf16.msra.mxu0 %v1463
      %1511 = vmatprep.subr.bf16.mxu0 0
      %1512 = vmatpush2.bf16.msra.mxu0 %v1478
      %1513 = vmatprep.subr.bf16.mxu0 0
      %1514 = vmatpush2.bf16.msra.mxu0 %v1477
      %1515 = vmatprep.subr.bf16.mxu0 0
      %1516 = vmatpush2.bf16.msra.mxu0 %v1476
      %1517 = vmatprep.subr.bf16.mxu0 0
      %1518 = vmatpush2.bf16.msra.mxu0 %v1475
      %1519 = vmatprep.subr.bf16.mxu0 0
      %1520 = vmatpush2.bf16.msra.mxu0 %v1474
      %1521 = vmatprep.subr.bf16.mxu0 0
      %1522 = vmatpush2.bf16.msra.mxu0 %v1473
      %1523 = vmatprep.subr.bf16.mxu0 0
      %1524 = vmatpush2.bf16.msra.mxu0 %v1472
      %1525 = vmatprep.subr.bf16.mxu0 0
      %1526 = vmatpush2.bf16.msra.mxu0 %v1471
      %1527 = vmatprep.mubr.bf16.mxu0 %v1360
      %1528 = vmatmul.mubr.bf16.gmra.mxu0 %v1359
      %v1529 = vpop.f32.mrf.mxu0
      %v1530 = vadd.f32 %v1398, %v1529
      %v1531 = vpop.f32.mrf.mxu0
      %v1532 = vpop.f32.mrf.mxu0
      %v1533 = vpop.f32.mrf.mxu0
      %1534 = vdwg.mxu0
      %v1535 = vmax.f32 %v1530, 0.0
      %v1536 = vpack.c.bf16 %v1535, %v1535
      %v1537 = vld [vmem:[#allocation12] sm:$0xf]
      %v1538 = vld [vmem:[#allocation12 + $0x4] sm:$0xf]
      %v1539 = vld [vmem:[#allocation12 + $0x8] sm:$0xf]
      %v1540 = vld [vmem:[#allocation12 + $0xc] sm:$0xf]
      %v1541 = vld [vmem:[#allocation12 + $0x10] sm:$0xf]
      %v1542 = vld [vmem:[#allocation12 + $0x14] sm:$0xf]
      %v1543 = vld [vmem:[#allocation12 + $0x18] sm:$0xf]
      %v1544 = vld [vmem:[#allocation12 + $0x1c] sm:$0xf]
      %v1545 = vld [vmem:[#allocation12 + $0x20] sm:$0xf]
      %v1546 = vld [vmem:[#allocation12 + $0x24] sm:$0xf]
      %v1547 = vld [vmem:[#allocation12 + $0x28] sm:$0xf]
      %v1548 = vld [vmem:[#allocation12 + $0x2c] sm:$0xf]
      %v1549 = vld [vmem:[#allocation12 + $0x30] sm:$0xf]
      %v1550 = vld [vmem:[#allocation12 + $0x34] sm:$0xf]
      %v1551 = vld [vmem:[#allocation12 + $0x38] sm:$0xf]
      %v1552 = vld [vmem:[#allocation12 + $0x3c] sm:$0xf]
      %v1553 = vld [vmem:[%s8] sm:$0x1]
      %v1554 = vunpack.c.l.bf16 %v1553
      %v1555 = vlaneseq
      %v1556 = vshrl.u32 %v1555, 7
      %v1557 = vsub.s32 0, %v1556
      %v1558 = vrot.slane %v1554, %v1557
      %v1575 = vunpack.c.l.b16 %v1537
      %v1576 = vunpack.c.l.b16 %v1538
      %v1577 = vunpack.c.l.b16 %v1539
      %v1578 = vunpack.c.l.b16 %v1540
      %v1579 = vunpack.c.l.b16 %v1541
      %v1580 = vunpack.c.l.b16 %v1542
      %v1581 = vunpack.c.l.b16 %v1543
      %v1582 = vunpack.c.l.b16 %v1544
      %v1583 = vunpack.c.l.b16 %v1545
      %v1584 = vunpack.c.l.b16 %v1546
      %v1585 = vunpack.c.l.b16 %v1547
      %v1586 = vunpack.c.l.b16 %v1548
      %v1587 = vunpack.c.l.b16 %v1549
      %v1588 = vunpack.c.l.b16 %v1550
      %v1589 = vunpack.c.l.b16 %v1551
      %v1590 = vunpack.c.l.b16 %v1552
      %v1591 = vpack.c.b16 %v1576, %v1575
      %v1592 = vpack.c.b16 %v1578, %v1577
      %v1593 = vpack.c.b16 %v1580, %v1579
      %v1594 = vpack.c.b16 %v1582, %v1581
      %v1595 = vpack.c.b16 %v1584, %v1583
      %v1596 = vpack.c.b16 %v1586, %v1585
      %v1597 = vpack.c.b16 %v1588, %v1587
      %v1598 = vpack.c.b16 %v1590, %v1589
      %1607 = vmatprep.subr.bf16.mxu0 0
      %1608 = vmatpush1.bf16.msra.mxu0 %v1598
      %1609 = vmatprep.subr.bf16.mxu0 0
      %1610 = vmatpush1.bf16.msra.mxu0 %v1597
      %1611 = vmatprep.subr.bf16.mxu0 0
      %1612 = vmatpush1.bf16.msra.mxu0 %v1596
      %1613 = vmatprep.subr.bf16.mxu0 0
      %1614 = vmatpush1.bf16.msra.mxu0 %v1595
      %1615 = vmatprep.subr.bf16.mxu0 0
      %1616 = vmatpush1.bf16.msra.mxu0 %v1594
      %1617 = vmatprep.subr.bf16.mxu0 0
      %1618 = vmatpush1.bf16.msra.mxu0 %v1593
      %1619 = vmatprep.subr.bf16.mxu0 0
      %1620 = vmatpush1.bf16.msra.mxu0 %v1592
      %1621 = vmatprep.subr.bf16.mxu0 0
      %1622 = vmatpush1.bf16.msra.mxu0 %v1591
      %1623 = vmatprep.subr.bf16.mxu0 0
      %1624 = vmatpush2.bf16.msra.mxu0 0
      %1625 = vmatprep.subr.bf16.mxu0 0
      %1626 = vmatpush2.bf16.msra.mxu0 0
      %1627 = vmatprep.subr.bf16.mxu0 0
      %1628 = vmatpush2.bf16.msra.mxu0 0
      %1629 = vmatprep.subr.bf16.mxu0 0
      %1630 = vmatpush2.bf16.msra.mxu0 0
      %1631 = vmatprep.subr.bf16.mxu0 0
      %1632 = vmatpush2.bf16.msra.mxu0 0
      %1633 = vmatprep.subr.bf16.mxu0 0
      %1634 = vmatpush2.bf16.msra.mxu0 0
      %1635 = vmatprep.subr.bf16.mxu0 0
      %1636 = vmatpush2.bf16.msra.mxu0 0
      %1637 = vmatprep.subr.bf16.mxu0 0
      %1638 = vmatpush2.bf16.msra.mxu0 0
      %1639 = vmatprep.mubr.bf16.mxu0 0
      %1640 = vmatmul.mubr.bf16.gmra.mxu0 %v1536
      %v1641 = vpop.f32.mrf.mxu0
      %v1642 = vadd.f32 %v1558, %v1641
      %v1643 = vpop.f32.mrf.mxu0
      %v1644 = vpop.f32.mrf.mxu0
      %v1645 = vpop.f32.mrf.mxu0
      %1646 = vdwg.mxu0
      %v1647 = vmax.f32 %v1642, 0.0
      %v1648 = vpack.c.bf16 %v1647, %v1647
      %v1649 = vld [vmem:[#allocation14] sm:$0xf]
      %v1650 = vld [vmem:[#allocation14 + $0x4] sm:$0xf]
      %v1651 = vld [vmem:[#allocation14 + $0x8] sm:$0xf]
      %v1652 = vld [vmem:[#allocation14 + $0xc] sm:$0xf]
      %v1653 = vld [vmem:[#allocation14 + $0x10] sm:$0xf]
      %v1654 = vld [vmem:[#allocation14 + $0x14] sm:$0xf]
      %v1655 = vld [vmem:[#allocation14 + $0x18] sm:$0xf]
      %v1656 = vld [vmem:[#allocation14 + $0x1c] sm:$0xf]
      %v1657 = vld [vmem:[#allocation14 + $0x20] sm:$0xf]
      %v1658 = vld [vmem:[#allocation14 + $0x24] sm:$0xf]
      %v1659 = vld [vmem:[#allocation14 + $0x28] sm:$0xf]
      %v1660 = vld [vmem:[#allocation14 + $0x2c] sm:$0xf]
      %v1661 = vld [vmem:[#allocation14 + $0x30] sm:$0xf]
      %v1662 = vld [vmem:[#allocation14 + $0x34] sm:$0xf]
      %v1663 = vld [vmem:[#allocation14 + $0x38] sm:$0xf]
      %v1664 = vld [vmem:[#allocation14 + $0x3c] sm:$0xf]
      %v1665 = vld [vmem:[%s10] sm:$0x1]
      %v1666 = vunpack.c.l.bf16 %v1665
      %v1667 = vlaneseq
      %v1668 = vshrl.u32 %v1667, 7
      %v1669 = vsub.s32 0, %v1668
      %v1670 = vrot.slane %v1666, %v1669
      %v1687 = vunpack.c.l.b16 %v1649
      %v1688 = vunpack.c.l.b16 %v1650
      %v1689 = vunpack.c.l.b16 %v1651
      %v1690 = vunpack.c.l.b16 %v1652
      %v1691 = vunpack.c.l.b16 %v1653
      %v1692 = vunpack.c.l.b16 %v1654
      %v1693 = vunpack.c.l.b16 %v1655
      %v1694 = vunpack.c.l.b16 %v1656
      %v1695 = vunpack.c.l.b16 %v1657
      %v1696 = vunpack.c.l.b16 %v1658
      %v1697 = vunpack.c.l.b16 %v1659
      %v1698 = vunpack.c.l.b16 %v1660
      %v1699 = vunpack.c.l.b16 %v1661
      %v1700 = vunpack.c.l.b16 %v1662
      %v1701 = vunpack.c.l.b16 %v1663
      %v1702 = vunpack.c.l.b16 %v1664
      %v1703 = vpack.c.b16 %v1688, %v1687
      %v1704 = vpack.c.b16 %v1690, %v1689
      %v1705 = vpack.c.b16 %v1692, %v1691
      %v1706 = vpack.c.b16 %v1694, %v1693
      %v1707 = vpack.c.b16 %v1696, %v1695
      %v1708 = vpack.c.b16 %v1698, %v1697
      %v1709 = vpack.c.b16 %v1700, %v1699
      %v1710 = vpack.c.b16 %v1702, %v1701
      %1719 = vmatprep.subr.bf16.mxu0 0
      %1720 = vmatpush1.bf16.msra.mxu0 %v1710
      %1721 = vmatprep.subr.bf16.mxu0 0
      %1722 = vmatpush1.bf16.msra.mxu0 %v1709
      %1723 = vmatprep.subr.bf16.mxu0 0
      %1724 = vmatpush1.bf16.msra.mxu0 %v1708
      %1725 = vmatprep.subr.bf16.mxu0 0
      %1726 = vmatpush1.bf16.msra.mxu0 %v1707
      %1727 = vmatprep.subr.bf16.mxu0 0
      %1728 = vmatpush1.bf16.msra.mxu0 %v1706
      %1729 = vmatprep.subr.bf16.mxu0 0
      %1730 = vmatpush1.bf16.msra.mxu0 %v1705
      %1731 = vmatprep.subr.bf16.mxu0 0
      %1732 = vmatpush1.bf16.msra.mxu0 %v1704
      %1733 = vmatprep.subr.bf16.mxu0 0
      %1734 = vmatpush1.bf16.msra.mxu0 %v1703
      %1735 = vmatprep.subr.bf16.mxu0 0
      %1736 = vmatpush2.bf16.msra.mxu0 0
      %1737 = vmatprep.subr.bf16.mxu0 0
      %1738 = vmatpush2.bf16.msra.mxu0 0
      %1739 = vmatprep.subr.bf16.mxu0 0
      %1740 = vmatpush2.bf16.msra.mxu0 0
      %1741 = vmatprep.subr.bf16.mxu0 0
      %1742 = vmatpush2.bf16.msra.mxu0 0
      %1743 = vmatprep.subr.bf16.mxu0 0
      %1744 = vmatpush2.bf16.msra.mxu0 0
      %1745 = vmatprep.subr.bf16.mxu0 0
      %1746 = vmatpush2.bf16.msra.mxu0 0
      %1747 = vmatprep.subr.bf16.mxu0 0
      %1748 = vmatpush2.bf16.msra.mxu0 0
      %1749 = vmatprep.subr.bf16.mxu0 0
      %1750 = vmatpush2.bf16.msra.mxu0 0
      %1751 = vmatprep.mubr.bf16.mxu0 0
      %1752 = vmatmul.mubr.bf16.gmra.mxu0 %v1648
      %v1753 = vpop.f32.mrf.mxu0
      %v1754 = vadd.f32 %v1670, %v1753
      %v1755 = vpop.f32.mrf.mxu0
      %v1756 = vpop.f32.mrf.mxu0
      %v1757 = vpop.f32.mrf.mxu0
      %1758 = vdwg.mxu0
      %v1759 = vmax.f32 %v1754, 0.0
      %v1760 = vpack.c.bf16 %v1759, %v1759
      %v1761 = vld [vmem:[#allocation15] sm:$0xf]
      %v1762 = vld [vmem:[#allocation15 + $0x4] sm:$0xf]
      %v1763 = vld [vmem:[#allocation15 + $0x8] sm:$0xf]
      %v1764 = vld [vmem:[#allocation15 + $0xc] sm:$0xf]
      %v1765 = vld [vmem:[#allocation15 + $0x10] sm:$0xf]
      %v1766 = vld [vmem:[#allocation15 + $0x14] sm:$0xf]
      %v1767 = vld [vmem:[#allocation15 + $0x18] sm:$0xf]
      %v1768 = vld [vmem:[#allocation15 + $0x1c] sm:$0xf]
      %v1769 = vld [vmem:[#allocation15 + $0x20] sm:$0xf]
      %v1770 = vld [vmem:[#allocation15 + $0x24] sm:$0xf]
      %v1771 = vld [vmem:[#allocation15 + $0x28] sm:$0xf]
      %v1772 = vld [vmem:[#allocation15 + $0x2c] sm:$0xf]
      %v1773 = vld [vmem:[#allocation15 + $0x30] sm:$0xf]
      %v1774 = vld [vmem:[#allocation15 + $0x34] sm:$0xf]
      %v1775 = vld [vmem:[#allocation15 + $0x38] sm:$0xf]
      %v1776 = vld [vmem:[#allocation15 + $0x3c] sm:$0xf]
      %v1777 = vld [vmem:[%s12] sm:$0x1]
      %v1778 = vunpack.c.l.bf16 %v1777
      %v1779 = vlaneseq
      %v1780 = vshrl.u32 %v1779, 7
      %v1781 = vsub.s32 0, %v1780
      %v1782 = vrot.slane %v1778, %v1781
      %v1799 = vunpack.c.l.b16 %v1761
      %v1800 = vunpack.c.l.b16 %v1762
      %v1801 = vunpack.c.l.b16 %v1763
      %v1802 = vunpack.c.l.b16 %v1764
      %v1803 = vunpack.c.l.b16 %v1765
      %v1804 = vunpack.c.l.b16 %v1766
      %v1805 = vunpack.c.l.b16 %v1767
      %v1806 = vunpack.c.l.b16 %v1768
      %v1807 = vunpack.c.l.b16 %v1769
      %v1808 = vunpack.c.l.b16 %v1770
      %v1809 = vunpack.c.l.b16 %v1771
      %v1810 = vunpack.c.l.b16 %v1772
      %v1811 = vunpack.c.l.b16 %v1773
      %v1812 = vunpack.c.l.b16 %v1774
      %v1813 = vunpack.c.l.b16 %v1775
      %v1814 = vunpack.c.l.b16 %v1776
      %v1815 = vpack.c.b16 %v1800, %v1799
      %v1816 = vpack.c.b16 %v1802, %v1801
      %v1817 = vpack.c.b16 %v1804, %v1803
      %v1818 = vpack.c.b16 %v1806, %v1805
      %v1819 = vpack.c.b16 %v1808, %v1807
      %v1820 = vpack.c.b16 %v1810, %v1809
      %v1821 = vpack.c.b16 %v1812, %v1811
      %v1822 = vpack.c.b16 %v1814, %v1813
      %1831 = vmatprep.subr.bf16.mxu0 0
      %1832 = vmatpush1.bf16.msra.mxu0 %v1822
      %1833 = vmatprep.subr.bf16.mxu0 0
      %1834 = vmatpush1.bf16.msra.mxu0 %v1821
      %1835 = vmatprep.subr.bf16.mxu0 0
      %1836 = vmatpush1.bf16.msra.mxu0 %v1820
      %1837 = vmatprep.subr.bf16.mxu0 0
      %1838 = vmatpush1.bf16.msra.mxu0 %v1819
      %1839 = vmatprep.subr.bf16.mxu0 0
      %1840 = vmatpush1.bf16.msra.mxu0 %v1818
      %1841 = vmatprep.subr.bf16.mxu0 0
      %1842 = vmatpush1.bf16.msra.mxu0 %v1817
      %1843 = vmatprep.subr.bf16.mxu0 0
      %1844 = vmatpush1.bf16.msra.mxu0 %v1816
      %1845 = vmatprep.subr.bf16.mxu0 0
      %1846 = vmatpush1.bf16.msra.mxu0 %v1815
      %1847 = vmatprep.subr.bf16.mxu0 0
      %1848 = vmatpush2.bf16.msra.mxu0 0
      %1849 = vmatprep.subr.bf16.mxu0 0
      %1850 = vmatpush2.bf16.msra.mxu0 0
      %1851 = vmatprep.subr.bf16.mxu0 0
      %1852 = vmatpush2.bf16.msra.mxu0 0
      %1853 = vmatprep.subr.bf16.mxu0 0
      %1854 = vmatpush2.bf16.msra.mxu0 0
      %1855 = vmatprep.subr.bf16.mxu0 0
      %1856 = vmatpush2.bf16.msra.mxu0 0
      %1857 = vmatprep.subr.bf16.mxu0 0
      %1858 = vmatpush2.bf16.msra.mxu0 0
      %1859 = vmatprep.subr.bf16.mxu0 0
      %1860 = vmatpush2.bf16.msra.mxu0 0
      %1861 = vmatprep.subr.bf16.mxu0 0
      %1862 = vmatpush2.bf16.msra.mxu0 0
      %1863 = vmatprep.mubr.bf16.mxu0 0
      %1864 = vmatmul.mubr.bf16.gmra.mxu0 %v1760
      %v1865 = vpop.f32.mrf.mxu0
      %v1866 = vadd.f32 %v1782, %v1865
      %v1867 = vpop.f32.mrf.mxu0
      %v1868 = vpop.f32.mrf.mxu0
      %v1869 = vpop.f32.mrf.mxu0
      %1870 = vdwg.mxu0
      %1871 = vst [vmem:[#allocation17] sm:$0xff] %v1866
    $region93: #{linear_classifier_forward.1} parent=1 // pred_fallthru
      _
    // Predicated region
    $region94: #{linear_classifier_forward.1} parent=1 // pred_check
      _
    $region95: #{linear_classifier_forward.1} parent=1 // pred_check_branch
      %1873 = sbr.rel (0) target = $region97
    $region96: #{linear_classifier_forward.1} parent=1 // pred_region
      %s1875 = ssub.s32 128, 128
      %1876 = vsyncadd [#allocation5], %s1875
      %s1878 = sshll.u32 [#allocation17], 4
      %s1879 = int_to_ptr.vmem [resolvable:$true] %s1878
      %1881 = dma.vmem_to_hbm [thread:$0]  %s1879, 128, %s13, [#allocation5]
    $region97: #{linear_classifier_forward.1} parent=1 // pred_fallthru
      _
    // Predicated region
    $region98: #{linear_classifier_forward.1} parent=1 // pred_check
      _
    $region99: #{linear_classifier_forward.1} parent=1 // pred_check_branch
      %1883 = sbr.rel (0) target = $region101
    $region100: #{linear_classifier_forward.1} parent=1 // pred_region
      %1884 = dma.done [#allocation5], 128
    $region101: #{linear_classifier_forward.1} parent=1 // pred_fallthru
      _
    %1885 = vsyncpa [#allocation4], 1
    %1886 = vsyncpa [#allocation7], 1
    %1887 = vsyncpa [#allocation10], 1
    %1888 = vsyncpa [#allocation13], 1
    %1889 = vsyncpa [#allocation16], 1
    %1890 = vsyncpa [#allocation5], 1

</llo_original>
